<compile_context>
chip_gen: v6e
topology: v6e:2x2x1
jax: 0.10.0
libtpu: 0.0.40
codegen_flags: <defaults>
</compile_context>

<pallas_src>
import math

import jax
import jax.numpy as jnp
from jax import lax
from jax.experimental import pallas as pl

# model hyper-parameters (small, consistent with the BERT tutorial structure)
d_model = 32
d_k = 8
d_v = 8
n_heads = 4
d_ff = 64

_NEG_INF = -1000000000.0


def _layernorm(x, gamma, beta, eps=1e-5):
    mean = jnp.mean(x, axis=-1, keepdims=True)
    var = jnp.mean((x - mean) ** 2, axis=-1, keepdims=True)
    return (x - mean) * lax.rsqrt(var + eps) * gamma + beta


def _split_heads(m, hd, bs):
    # (B*S, n_heads*hd) -> (n_heads, B*S, hd)
    # m.T is a clean last-two-dims transpose; the reshape only splits the sublane-major
    # axis (n_heads*hd -> n_heads x hd), so no lane-axis relayout is required.
    return jnp.swapaxes(m.T.reshape(n_heads, hd, bs), 1, 2)


def encoder_kernel(x_ref, mask_ref, wq_ref, bq_ref, wk_ref, bk_ref, wv_ref, bv_ref,
                   wo_ref, bo_ref, gamma_ref, beta_ref, w1_ref, b1_ref, w2_ref, b2_ref,
                   out_ref, attn_ref):
    B, S, D = x_ref.shape
    BS = B * S

    x2d = x_ref[...].reshape(BS, D)            # fold batch into sublanes (major merge)

    # fused QKV projections for the whole batch (one MXU push each)
    q = jnp.dot(x2d, wq_ref[...], preferred_element_type=jnp.float32) + bq_ref[...]
    k = jnp.dot(x2d, wk_ref[...], preferred_element_type=jnp.float32) + bk_ref[...]
    v = jnp.dot(x2d, wv_ref[...], preferred_element_type=jnp.float32) + bv_ref[...]

    qh = _split_heads(q, d_k, BS)              # (H, B*S, d_k)
    kh = _split_heads(k, d_k, BS)              # (H, B*S, d_k)
    vh = _split_heads(v, d_v, BS)              # (H, B*S, d_v)

    scale = 1.0 / math.sqrt(d_k)
    ctx_parts = []
    for b in range(B):                         # static unroll over the tiny batch
        lo, hi = b * S, (b + 1) * S            # 8-aligned sublane slices
        q_b, k_b, v_b = qh[:, lo:hi, :], kh[:, lo:hi, :], vh[:, lo:hi, :]

        # all heads at once, batched over the leading head axis
        s_b = jnp.einsum('hqd,hkd->hqk', q_b, k_b,
                         preferred_element_type=jnp.float32) * scale     # (H, S, S)
        masked = (mask_ref[b] > 0)[None, :, :]  # mask compare hoisted out of the head dim
        s_b = jnp.where(masked, _NEG_INF, s_b)
        s_b = s_b - jnp.max(s_b, axis=-1, keepdims=True)
        e = jnp.exp(s_b)
        attn_b = e / jnp.sum(e, axis=-1, keepdims=True)
        attn_ref[b] = attn_b                   # one packed (H, S, S) store per batch

        ctx_parts.append(jnp.einsum('hqk,hkd->hqd', attn_b, v_b,
                                    preferred_element_type=jnp.float32))  # (H, S, d_v)

    ctx = jnp.concatenate(ctx_parts, axis=1)   # (H, B*S, d_v), sublane-axis concat

    # output projection with W_O folded per head: out = sum_h ctx_h @ W_O[h*d_v:(h+1)*d_v, :]
    # (no lane-axis concatenation of heads)
    wo = wo_ref[...]
    o = x2d + bo_ref[...]                      # residual + output-projection bias
    for h in range(n_heads):
        o = o + jnp.dot(ctx[h], wo[h * d_v:(h + 1) * d_v, :],
                        preferred_element_type=jnp.float32)
    o = _layernorm(o, gamma_ref[...], beta_ref[...])

    # position-wise FFN fused in the same kernel (no HBM round-trip of attn output)
    h1 = jnp.dot(o, w1_ref[...], preferred_element_type=jnp.float32) + b1_ref[...]
    h1 = h1 * 0.5 * (1.0 + lax.erf(h1 / math.sqrt(2.0)))                  # gelu (erf form)
    y = jnp.dot(h1, w2_ref[...], preferred_element_type=jnp.float32) + b2_ref[...]

    out_ref[...] = y.reshape(B, S, D)


def encoder_layer(x, mask, params):
    """x: (B, S, d_model) f32, mask: (B, S, S) int32 (1 == masked)."""
    B, S, D = x.shape
    # Grid-free single block: everything (activations + all weights) comfortably fits
    # VMEM at these sizes, so there is no per-grid-step overhead and no double-buffer
    # bookkeeping for the constant weight operands.
    return pl.pallas_call(
        encoder_kernel,
        out_shape=(jax.ShapeDtypeStruct((B, S, D), jnp.float32),
                   jax.ShapeDtypeStruct((B, n_heads, S, S), jnp.float32)),
    )(x, mask, *params)


def reference(x, mask, params):
    """Pure-JAX reference of the same forward pass (for verification)."""
    (wq, bq, wk, bk, wv, bv, wo, bo, gamma, beta, w1, b1, w2, b2) = params
    B, S, D = x.shape
    q = (x @ wq + bq).reshape(B, S, n_heads, d_k).transpose(0, 2, 1, 3)
    k = (x @ wk + bk).reshape(B, S, n_heads, d_k).transpose(0, 2, 1, 3)
    v = (x @ wv + bv).reshape(B, S, n_heads, d_v).transpose(0, 2, 1, 3)
    scores = jnp.einsum('bhqd,bhkd->bhqk', q, k) / math.sqrt(d_k)
    scores = jnp.where(mask[:, None, :, :] > 0, _NEG_INF, scores)
    attn = jax.nn.softmax(scores, axis=-1)
    ctx = jnp.einsum('bhqk,bhkd->bhqd', attn, v).transpose(0, 2, 1, 3).reshape(B, S, n_heads * d_v)
    out = ctx @ wo + bo + x
    mean = out.mean(-1, keepdims=True)
    var = ((out - mean) ** 2).mean(-1, keepdims=True)
    out = (out - mean) * lax.rsqrt(var + 1e-5) * gamma + beta
    h = out @ w1 + b1
    h = h * 0.5 * (1.0 + lax.erf(h / math.sqrt(2.0)))
    return h @ w2 + b2, attn


if __name__ == "__main__":
    B, S = 2, 8
    key = jax.random.PRNGKey(0)
    keys = jax.random.split(key, 8)

    x = jax.random.normal(keys[0], (B, S, d_model), dtype=jnp.float32)
    # mask the last two positions of each sequence (e.g. padding), like a pad-mask
    mask = jnp.zeros((B, S, S), dtype=jnp.int32).at[:, :, -2:].set(1)

    init = lambda k, shape: (0.02 * jax.random.normal(k, shape)).astype(jnp.float32)
    wq = init(keys[1], (d_model, d_k * n_heads)); bq = jnp.zeros((1, d_k * n_heads), jnp.float32)
    wk = init(keys[2], (d_model, d_k * n_heads)); bk = jnp.zeros((1, d_k * n_heads), jnp.float32)
    wv = init(keys[3], (d_model, d_v * n_heads)); bv = jnp.zeros((1, d_v * n_heads), jnp.float32)
    wo = init(keys[4], (n_heads * d_v, d_model)); bo = jnp.zeros((1, d_model), jnp.float32)
    gamma = jnp.ones((1, d_model), jnp.float32);  beta = jnp.zeros((1, d_model), jnp.float32)
    w1 = init(keys[5], (d_model, d_ff));          b1 = jnp.zeros((1, d_ff), jnp.float32)
    w2 = init(keys[6], (d_ff, d_model));          b2 = jnp.zeros((1, d_model), jnp.float32)

    params = (wq, bq, wk, bk, wv, bv, wo, bo, gamma, beta, w1, b1, w2, b2)

    out, attn = jax.block_until_ready(encoder_layer(x, mask, params))
    ref_out, ref_attn = reference(x, mask, params)

    assert out.shape == (B, S, d_model) and attn.shape == (B, n_heads, S, S)
    assert jnp.allclose(out, ref_out, atol=1e-4, rtol=1e-4)
    assert jnp.allclose(attn, ref_attn, atol=1e-5, rtol=1e-5)
    print("KERNEL_OK")
</pallas_src>

<mosaic_0001>
module attributes {stable_mosaic.version = 11 : i64} {
  func.func @encoder_kernel(%arg0: memref<2x8x32xf32, #tpu.memory_space<vmem>>, %arg1: memref<2x8x8xi32, #tpu.memory_space<vmem>>, %arg2: memref<32x32xf32, #tpu.memory_space<vmem>>, %arg3: memref<1x32xf32, #tpu.memory_space<vmem>>, %arg4: memref<32x32xf32, #tpu.memory_space<vmem>>, %arg5: memref<1x32xf32, #tpu.memory_space<vmem>>, %arg6: memref<32x32xf32, #tpu.memory_space<vmem>>, %arg7: memref<1x32xf32, #tpu.memory_space<vmem>>, %arg8: memref<32x32xf32, #tpu.memory_space<vmem>>, %arg9: memref<1x32xf32, #tpu.memory_space<vmem>>, %arg10: memref<1x32xf32, #tpu.memory_space<vmem>>, %arg11: memref<1x32xf32, #tpu.memory_space<vmem>>, %arg12: memref<32x64xf32, #tpu.memory_space<vmem>>, %arg13: memref<1x64xf32, #tpu.memory_space<vmem>>, %arg14: memref<64x32xf32, #tpu.memory_space<vmem>>, %arg15: memref<1x32xf32, #tpu.memory_space<vmem>>, %arg16: memref<2x8x32xf32, #tpu.memory_space<vmem>>, %arg17: memref<2x4x8x8xf32, #tpu.memory_space<vmem>>) attributes {dimension_semantics = [], scalar_prefetch = 0 : i64, scratch_operands = 0 : i64, tpu.core_type = #tpu.core_type<tc>} {
    %c0 = arith.constant 0 : index
    %c0_0 = arith.constant 0 : index
    %c0_1 = arith.constant 0 : index
    %0 = vector.load %arg0[%c0, %c0_0, %c0_1] : memref<2x8x32xf32, #tpu.memory_space<vmem>>, vector<2x8x32xf32>
    %1 = vector.shape_cast %0 : vector<2x8x32xf32> to vector<16x32xf32>
    %c0_2 = arith.constant 0 : index
    %c0_3 = arith.constant 0 : index
    %2 = vector.load %arg2[%c0_2, %c0_3] : memref<32x32xf32, #tpu.memory_space<vmem>>, vector<32x32xf32>
    %cst = arith.constant dense<0.000000e+00> : vector<16x32xf32>
    %3 = tpu.matmul %1, %2, %cst {dimension_numbers = #tpu.dot_dimension_numbers<[1], [0], [0], [1], [0, 0, 1, 1], [], []>} : vector<16x32xf32>, vector<32x32xf32>, vector<16x32xf32> -> vector<16x32xf32>
    %c0_4 = arith.constant 0 : index
    %c0_5 = arith.constant 0 : index
    %4 = vector.load %arg3[%c0_4, %c0_5] : memref<1x32xf32, #tpu.memory_space<vmem>>, vector<1x32xf32>
    %5 = vector.broadcast %4 : vector<1x32xf32> to vector<16x32xf32>
    %6 = arith.addf %3, %5 : vector<16x32xf32>
    %c0_6 = arith.constant 0 : index
    %c0_7 = arith.constant 0 : index
    %7 = vector.load %arg4[%c0_6, %c0_7] : memref<32x32xf32, #tpu.memory_space<vmem>>, vector<32x32xf32>
    %cst_8 = arith.constant dense<0.000000e+00> : vector<16x32xf32>
    %8 = tpu.matmul %1, %7, %cst_8 {dimension_numbers = #tpu.dot_dimension_numbers<[1], [0], [0], [1], [0, 0, 1, 1], [], []>} : vector<16x32xf32>, vector<32x32xf32>, vector<16x32xf32> -> vector<16x32xf32>
    %c0_9 = arith.constant 0 : index
    %c0_10 = arith.constant 0 : index
    %9 = vector.load %arg5[%c0_9, %c0_10] : memref<1x32xf32, #tpu.memory_space<vmem>>, vector<1x32xf32>
    %10 = vector.broadcast %9 : vector<1x32xf32> to vector<16x32xf32>
    %11 = arith.addf %8, %10 : vector<16x32xf32>
    %c0_11 = arith.constant 0 : index
    %c0_12 = arith.constant 0 : index
    %12 = vector.load %arg6[%c0_11, %c0_12] : memref<32x32xf32, #tpu.memory_space<vmem>>, vector<32x32xf32>
    %cst_13 = arith.constant dense<0.000000e+00> : vector<16x32xf32>
    %13 = tpu.matmul %1, %12, %cst_13 {dimension_numbers = #tpu.dot_dimension_numbers<[1], [0], [0], [1], [0, 0, 1, 1], [], []>} : vector<16x32xf32>, vector<32x32xf32>, vector<16x32xf32> -> vector<16x32xf32>
    %c0_14 = arith.constant 0 : index
    %c0_15 = arith.constant 0 : index
    %14 = vector.load %arg7[%c0_14, %c0_15] : memref<1x32xf32, #tpu.memory_space<vmem>>, vector<1x32xf32>
    %15 = vector.broadcast %14 : vector<1x32xf32> to vector<16x32xf32>
    %16 = arith.addf %13, %15 : vector<16x32xf32>
    %17 = tpu.transpose %6, [1, 0] : vector<16x32xf32> -> vector<32x16xf32>
    %18 = vector.shape_cast %17 : vector<32x16xf32> to vector<4x8x16xf32>
    %19 = tpu.transpose %18, [0, 2, 1] : vector<4x8x16xf32> -> vector<4x16x8xf32>
    %20 = tpu.transpose %11, [1, 0] : vector<16x32xf32> -> vector<32x16xf32>
    %21 = vector.shape_cast %20 : vector<32x16xf32> to vector<4x8x16xf32>
    %22 = tpu.transpose %21, [0, 2, 1] : vector<4x8x16xf32> -> vector<4x16x8xf32>
    %23 = tpu.transpose %16, [1, 0] : vector<16x32xf32> -> vector<32x16xf32>
    %24 = vector.shape_cast %23 : vector<32x16xf32> to vector<4x8x16xf32>
    %25 = tpu.transpose %24, [0, 2, 1] : vector<4x8x16xf32> -> vector<4x16x8xf32>
    %26 = vector.extract_strided_slice %19 {offsets = [0, 0, 0], sizes = [4, 8, 8], strides = [1, 1, 1]} : vector<4x16x8xf32> to vector<4x8x8xf32>
    %27 = vector.extract_strided_slice %22 {offsets = [0, 0, 0], sizes = [4, 8, 8], strides = [1, 1, 1]} : vector<4x16x8xf32> to vector<4x8x8xf32>
    %28 = vector.extract_strided_slice %25 {offsets = [0, 0, 0], sizes = [4, 8, 8], strides = [1, 1, 1]} : vector<4x16x8xf32> to vector<4x8x8xf32>
    "tpu.trace_start"() <{level = 10 : i32, message = "hqd,hkd->hqk"}> : () -> ()
    %cst_16 = arith.constant dense<0.000000e+00> : vector<4x8x8xf32>
    %29 = tpu.matmul %26, %27, %cst_16 {dimension_numbers = #tpu.dot_dimension_numbers<[2], [2], [1], [1], [0, 0, 0, 1, 1, 1], [0], [0]>} : vector<4x8x8xf32>, vector<4x8x8xf32>, vector<4x8x8xf32> -> vector<4x8x8xf32>
    "tpu.trace_stop"() : () -> ()
    %cst_17 = arith.constant 0.353553385 : f32
    %30 = vector.broadcast %cst_17 : f32 to vector<4x8x8xf32>
    %31 = arith.mulf %29, %30 : vector<4x8x8xf32>
    %c0_18 = arith.constant 0 : index
    %c0_19 = arith.constant 0 : index
    %c0_20 = arith.constant 0 : index
    %32 = vector.load %arg1[%c0_18, %c0_19, %c0_20] : memref<2x8x8xi32, #tpu.memory_space<vmem>>, vector<1x8x8xi32>
    %33 = vector.shape_cast %32 : vector<1x8x8xi32> to vector<8x8xi32>
    %c0_i32 = arith.constant 0 : i32
    %34 = vector.broadcast %c0_i32 : i32 to vector<8x8xi32>
    %35 = arith.cmpi sgt, %33, %34 : vector<8x8xi32>
    %36 = vector.shape_cast %35 : vector<8x8xi1> to vector<1x8x8xi1>
    %cst_21 = arith.constant -1.000000e+09 : f32
    %37 = vector.shape_cast %36 : vector<1x8x8xi1> to vector<1x8x8xi1>
    %38 = vector.broadcast %37 : vector<1x8x8xi1> to vector<4x8x8xi1>
    %39 = vector.broadcast %cst_21 : f32 to vector<4x8x8xf32>
    %40 = arith.select %38, %39, %31 : vector<4x8x8xi1>, vector<4x8x8xf32>
    %cst_22 = arith.constant dense<0xFF800000> : vector<4x8xf32>
    %41 = vector.multi_reduction <maximumf>, %40, %cst_22 [2] : vector<4x8x8xf32> to vector<4x8xf32>
    %42 = vector.shape_cast %41 : vector<4x8xf32> to vector<4x8x1xf32>
    %43 = vector.broadcast %42 : vector<4x8x1xf32> to vector<4x8x8xf32>
    %44 = arith.subf %40, %43 : vector<4x8x8xf32>
    %45 = math.exp %44 : vector<4x8x8xf32>
    %cst_23 = arith.constant dense<0.000000e+00> : vector<4x8xf32>
    %46 = vector.multi_reduction <add>, %45, %cst_23 [2] : vector<4x8x8xf32> to vector<4x8xf32>
    %47 = vector.shape_cast %46 : vector<4x8xf32> to vector<4x8x1xf32>
    %48 = vector.broadcast %47 : vector<4x8x1xf32> to vector<4x8x8xf32>
    %49 = arith.divf %45, %48 : vector<4x8x8xf32>
    %c0_24 = arith.constant 0 : index
    %c0_25 = arith.constant 0 : index
    %c0_26 = arith.constant 0 : index
    %c0_27 = arith.constant 0 : index
    %50 = vector.load %arg17[%c0_24, %c0_25, %c0_26, %c0_27] : memref<2x4x8x8xf32, #tpu.memory_space<vmem>>, vector<1x4x8x8xf32>
    %51 = vector.shape_cast %50 : vector<1x4x8x8xf32> to vector<4x8x8xf32>
    %52 = vector.shape_cast %49 : vector<4x8x8xf32> to vector<1x4x8x8xf32>
    tpu.vector_store %arg17[%c0_24, %c0_25, %c0_26, %c0_27], %52 {strides = array<i32>} : memref<2x4x8x8xf32, #tpu.memory_space<vmem>>, vector<1x4x8x8xf32>,
    "tpu.trace_start"() <{level = 10 : i32, message = "hqk,hkd->hqd"}> : () -> ()
    %cst_28 = arith.constant dense<0.000000e+00> : vector<4x8x8xf32>
    %53 = tpu.matmul %49, %28, %cst_28 {dimension_numbers = #tpu.dot_dimension_numbers<[2], [1], [1], [2], [0, 0, 0, 1, 1, 2], [0], [0]>} : vector<4x8x8xf32>, vector<4x8x8xf32>, vector<4x8x8xf32> -> vector<4x8x8xf32>
    "tpu.trace_stop"() : () -> ()
    %54 = vector.extract_strided_slice %19 {offsets = [0, 8, 0], sizes = [4, 8, 8], strides = [1, 1, 1]} : vector<4x16x8xf32> to vector<4x8x8xf32>
    %55 = vector.extract_strided_slice %22 {offsets = [0, 8, 0], sizes = [4, 8, 8], strides = [1, 1, 1]} : vector<4x16x8xf32> to vector<4x8x8xf32>
    %56 = vector.extract_strided_slice %25 {offsets = [0, 8, 0], sizes = [4, 8, 8], strides = [1, 1, 1]} : vector<4x16x8xf32> to vector<4x8x8xf32>
    "tpu.trace_start"() <{level = 10 : i32, message = "hqd,hkd->hqk"}> : () -> ()
    %cst_29 = arith.constant dense<0.000000e+00> : vector<4x8x8xf32>
    %57 = tpu.matmul %54, %55, %cst_29 {dimension_numbers = #tpu.dot_dimension_numbers<[2], [2], [1], [1], [0, 0, 0, 1, 1, 1], [0], [0]>} : vector<4x8x8xf32>, vector<4x8x8xf32>, vector<4x8x8xf32> -> vector<4x8x8xf32>
    "tpu.trace_stop"() : () -> ()
    %cst_30 = arith.constant 0.353553385 : f32
    %58 = vector.broadcast %cst_30 : f32 to vector<4x8x8xf32>
    %59 = arith.mulf %57, %58 : vector<4x8x8xf32>
    %c1 = arith.constant 1 : index
    %c0_31 = arith.constant 0 : index
    %c0_32 = arith.constant 0 : index
    %60 = vector.load %arg1[%c1, %c0_31, %c0_32] : memref<2x8x8xi32, #tpu.memory_space<vmem>>, vector<1x8x8xi32>
    %61 = vector.shape_cast %60 : vector<1x8x8xi32> to vector<8x8xi32>
    %c0_i32_33 = arith.constant 0 : i32
    %62 = vector.broadcast %c0_i32_33 : i32 to vector<8x8xi32>
    %63 = arith.cmpi sgt, %61, %62 : vector<8x8xi32>
    %64 = vector.shape_cast %63 : vector<8x8xi1> to vector<1x8x8xi1>
    %cst_34 = arith.constant -1.000000e+09 : f32
    %65 = vector.shape_cast %64 : vector<1x8x8xi1> to vector<1x8x8xi1>
    %66 = vector.broadcast %65 : vector<1x8x8xi1> to vector<4x8x8xi1>
    %67 = vector.broadcast %cst_34 : f32 to vector<4x8x8xf32>
    %68 = arith.select %66, %67, %59 : vector<4x8x8xi1>, vector<4x8x8xf32>
    %cst_35 = arith.constant dense<0xFF800000> : vector<4x8xf32>
    %69 = vector.multi_reduction <maximumf>, %68, %cst_35 [2] : vector<4x8x8xf32> to vector<4x8xf32>
    %70 = vector.shape_cast %69 : vector<4x8xf32> to vector<4x8x1xf32>
    %71 = vector.broadcast %70 : vector<4x8x1xf32> to vector<4x8x8xf32>
    %72 = arith.subf %68, %71 : vector<4x8x8xf32>
    %73 = math.exp %72 : vector<4x8x8xf32>
    %cst_36 = arith.constant dense<0.000000e+00> : vector<4x8xf32>
    %74 = vector.multi_reduction <add>, %73, %cst_36 [2] : vector<4x8x8xf32> to vector<4x8xf32>
    %75 = vector.shape_cast %74 : vector<4x8xf32> to vector<4x8x1xf32>
    %76 = vector.broadcast %75 : vector<4x8x1xf32> to vector<4x8x8xf32>
    %77 = arith.divf %73, %76 : vector<4x8x8xf32>
    %c1_37 = arith.constant 1 : index
    %c0_38 = arith.constant 0 : index
    %c0_39 = arith.constant 0 : index
    %c0_40 = arith.constant 0 : index
    %78 = vector.load %arg17[%c1_37, %c0_38, %c0_39, %c0_40] : memref<2x4x8x8xf32, #tpu.memory_space<vmem>>, vector<1x4x8x8xf32>
    %79 = vector.shape_cast %78 : vector<1x4x8x8xf32> to vector<4x8x8xf32>
    %80 = vector.shape_cast %77 : vector<4x8x8xf32> to vector<1x4x8x8xf32>
    tpu.vector_store %arg17[%c1_37, %c0_38, %c0_39, %c0_40], %80 {strides = array<i32>} : memref<2x4x8x8xf32, #tpu.memory_space<vmem>>, vector<1x4x8x8xf32>,
    "tpu.trace_start"() <{level = 10 : i32, message = "hqk,hkd->hqd"}> : () -> ()
    %cst_41 = arith.constant dense<0.000000e+00> : vector<4x8x8xf32>
    %81 = tpu.matmul %77, %56, %cst_41 {dimension_numbers = #tpu.dot_dimension_numbers<[2], [1], [1], [2], [0, 0, 0, 1, 1, 2], [0], [0]>} : vector<4x8x8xf32>, vector<4x8x8xf32>, vector<4x8x8xf32> -> vector<4x8x8xf32>
    "tpu.trace_stop"() : () -> ()
    %82 = tpu.concatenate %53, %81 in 1 : vector<4x8x8xf32>, vector<4x8x8xf32> -> vector<4x16x8xf32>
    %c0_42 = arith.constant 0 : index
    %c0_43 = arith.constant 0 : index
    %83 = vector.load %arg8[%c0_42, %c0_43] : memref<32x32xf32, #tpu.memory_space<vmem>>, vector<32x32xf32>
    %c0_44 = arith.constant 0 : index
    %c0_45 = arith.constant 0 : index
    %84 = vector.load %arg9[%c0_44, %c0_45] : memref<1x32xf32, #tpu.memory_space<vmem>>, vector<1x32xf32>
    %85 = vector.broadcast %84 : vector<1x32xf32> to vector<16x32xf32>
    %86 = arith.addf %1, %85 : vector<16x32xf32>
    %87 = vector.extract_strided_slice %82 {offsets = [0, 0, 0], sizes = [1, 16, 8], strides = [1, 1, 1]} : vector<4x16x8xf32> to vector<1x16x8xf32>
    %88 = vector.shape_cast %87 : vector<1x16x8xf32> to vector<16x8xf32>
    %89 = vector.extract_strided_slice %83 {offsets = [0, 0], sizes = [8, 32], strides = [1, 1]} : vector<32x32xf32> to vector<8x32xf32>
    %cst_46 = arith.constant dense<0.000000e+00> : vector<16x32xf32>
    %90 = tpu.matmul %88, %89, %cst_46 {dimension_numbers = #tpu.dot_dimension_numbers<[1], [0], [0], [1], [0, 0, 1, 1], [], []>} : vector<16x8xf32>, vector<8x32xf32>, vector<16x32xf32> -> vector<16x32xf32>
    %91 = arith.addf %86, %90 : vector<16x32xf32>
    %92 = vector.extract_strided_slice %82 {offsets = [1, 0, 0], sizes = [1, 16, 8], strides = [1, 1, 1]} : vector<4x16x8xf32> to vector<1x16x8xf32>
    %93 = vector.shape_cast %92 : vector<1x16x8xf32> to vector<16x8xf32>
    %94 = vector.extract_strided_slice %83 {offsets = [8, 0], sizes = [8, 32], strides = [1, 1]} : vector<32x32xf32> to vector<8x32xf32>
    %cst_47 = arith.constant dense<0.000000e+00> : vector<16x32xf32>
    %95 = tpu.matmul %93, %94, %cst_47 {dimension_numbers = #tpu.dot_dimension_numbers<[1], [0], [0], [1], [0, 0, 1, 1], [], []>} : vector<16x8xf32>, vector<8x32xf32>, vector<16x32xf32> -> vector<16x32xf32>
    %96 = arith.addf %91, %95 : vector<16x32xf32>
    %97 = vector.extract_strided_slice %82 {offsets = [2, 0, 0], sizes = [1, 16, 8], strides = [1, 1, 1]} : vector<4x16x8xf32> to vector<1x16x8xf32>
    %98 = vector.shape_cast %97 : vector<1x16x8xf32> to vector<16x8xf32>
    %99 = vector.extract_strided_slice %83 {offsets = [16, 0], sizes = [8, 32], strides = [1, 1]} : vector<32x32xf32> to vector<8x32xf32>
    %cst_48 = arith.constant dense<0.000000e+00> : vector<16x32xf32>
    %100 = tpu.matmul %98, %99, %cst_48 {dimension_numbers = #tpu.dot_dimension_numbers<[1], [0], [0], [1], [0, 0, 1, 1], [], []>} : vector<16x8xf32>, vector<8x32xf32>, vector<16x32xf32> -> vector<16x32xf32>
    %101 = arith.addf %96, %100 : vector<16x32xf32>
    %102 = vector.extract_strided_slice %82 {offsets = [3, 0, 0], sizes = [1, 16, 8], strides = [1, 1, 1]} : vector<4x16x8xf32> to vector<1x16x8xf32>
    %103 = vector.shape_cast %102 : vector<1x16x8xf32> to vector<16x8xf32>
    %104 = vector.extract_strided_slice %83 {offsets = [24, 0], sizes = [8, 32], strides = [1, 1]} : vector<32x32xf32> to vector<8x32xf32>
    %cst_49 = arith.constant dense<0.000000e+00> : vector<16x32xf32>
    %105 = tpu.matmul %103, %104, %cst_49 {dimension_numbers = #tpu.dot_dimension_numbers<[1], [0], [0], [1], [0, 0, 1, 1], [], []>} : vector<16x8xf32>, vector<8x32xf32>, vector<16x32xf32> -> vector<16x32xf32>
    %106 = arith.addf %101, %105 : vector<16x32xf32>
    %c0_50 = arith.constant 0 : index
    %c0_51 = arith.constant 0 : index
    %107 = vector.load %arg10[%c0_50, %c0_51] : memref<1x32xf32, #tpu.memory_space<vmem>>, vector<1x32xf32>
    %c0_52 = arith.constant 0 : index
    %c0_53 = arith.constant 0 : index
    %108 = vector.load %arg11[%c0_52, %c0_53] : memref<1x32xf32, #tpu.memory_space<vmem>>, vector<1x32xf32>
    %cst_54 = arith.constant dense<0.000000e+00> : vector<16xf32>
    %109 = vector.multi_reduction <add>, %106, %cst_54 [1] : vector<16x32xf32> to vector<16xf32>
    %110 = vector.shape_cast %109 : vector<16xf32> to vector<16x1xf32>
    %cst_55 = arith.constant 3.200000e+01 : f32
    %111 = vector.broadcast %cst_55 : f32 to vector<16x1xf32>
    %112 = arith.divf %110, %111 : vector<16x1xf32>
    %113 = vector.broadcast %112 : vector<16x1xf32> to vector<16x32xf32>
    %114 = arith.subf %106, %113 : vector<16x32xf32>
    %115 = arith.mulf %114, %114 : vector<16x32xf32>
    %cst_56 = arith.constant dense<0.000000e+00> : vector<16xf32>
    %116 = vector.multi_reduction <add>, %115, %cst_56 [1] : vector<16x32xf32> to vector<16xf32>
    %117 = vector.shape_cast %116 : vector<16xf32> to vector<16x1xf32>
    %cst_57 = arith.constant 3.200000e+01 : f32
    %118 = vector.broadcast %cst_57 : f32 to vector<16x1xf32>
    %119 = arith.divf %117, %118 : vector<16x1xf32>
    %120 = vector.broadcast %112 : vector<16x1xf32> to vector<16x32xf32>
    %121 = arith.subf %106, %120 : vector<16x32xf32>
    %cst_58 = arith.constant 9.99999974E-6 : f32
    %122 = vector.broadcast %cst_58 : f32 to vector<16x1xf32>
    %123 = arith.addf %119, %122 : vector<16x1xf32>
    %124 = math.rsqrt %123 : vector<16x1xf32>
    %125 = vector.broadcast %124 : vector<16x1xf32> to vector<16x32xf32>
    %126 = arith.mulf %121, %125 : vector<16x32xf32>
    %127 = vector.broadcast %107 : vector<1x32xf32> to vector<16x32xf32>
    %128 = arith.mulf %126, %127 : vector<16x32xf32>
    %129 = vector.broadcast %108 : vector<1x32xf32> to vector<16x32xf32>
    %130 = arith.addf %128, %129 : vector<16x32xf32>
    %c0_59 = arith.constant 0 : index
    %c0_60 = arith.constant 0 : index
    %131 = vector.load %arg12[%c0_59, %c0_60] : memref<32x64xf32, #tpu.memory_space<vmem>>, vector<32x64xf32>
    %cst_61 = arith.constant dense<0.000000e+00> : vector<16x64xf32>
    %132 = tpu.matmul %130, %131, %cst_61 {dimension_numbers = #tpu.dot_dimension_numbers<[1], [0], [0], [1], [0, 0, 1, 1], [], []>} : vector<16x32xf32>, vector<32x64xf32>, vector<16x64xf32> -> vector<16x64xf32>
    %c0_62 = arith.constant 0 : index
    %c0_63 = arith.constant 0 : index
    %133 = vector.load %arg13[%c0_62, %c0_63] : memref<1x64xf32, #tpu.memory_space<vmem>>, vector<1x64xf32>
    %134 = vector.broadcast %133 : vector<1x64xf32> to vector<16x64xf32>
    %135 = arith.addf %132, %134 : vector<16x64xf32>
    %cst_64 = arith.constant 5.000000e-01 : f32
    %136 = vector.broadcast %cst_64 : f32 to vector<16x64xf32>
    %137 = arith.mulf %135, %136 : vector<16x64xf32>
    %cst_65 = arith.constant 1.41421354 : f32
    %138 = vector.broadcast %cst_65 : f32 to vector<16x64xf32>
    %139 = arith.divf %135, %138 : vector<16x64xf32>
    %140 = math.erf %139 : vector<16x64xf32>
    %cst_66 = arith.constant 1.000000e+00 : f32
    %141 = vector.broadcast %cst_66 : f32 to vector<16x64xf32>
    %142 = arith.addf %141, %140 : vector<16x64xf32>
    %143 = arith.mulf %137, %142 : vector<16x64xf32>
    %c0_67 = arith.constant 0 : index
    %c0_68 = arith.constant 0 : index
    %144 = vector.load %arg14[%c0_67, %c0_68] : memref<64x32xf32, #tpu.memory_space<vmem>>, vector<64x32xf32>
    %cst_69 = arith.constant dense<0.000000e+00> : vector<16x32xf32>
    %145 = tpu.matmul %143, %144, %cst_69 {dimension_numbers = #tpu.dot_dimension_numbers<[1], [0], [0], [1], [0, 0, 1, 1], [], []>} : vector<16x64xf32>, vector<64x32xf32>, vector<16x32xf32> -> vector<16x32xf32>
    %c0_70 = arith.constant 0 : index
    %c0_71 = arith.constant 0 : index
    %146 = vector.load %arg15[%c0_70, %c0_71] : memref<1x32xf32, #tpu.memory_space<vmem>>, vector<1x32xf32>
    %147 = vector.broadcast %146 : vector<1x32xf32> to vector<16x32xf32>
    %148 = arith.addf %145, %147 : vector<16x32xf32>
    %149 = vector.shape_cast %148 : vector<16x32xf32> to vector<2x8x32xf32>
    %c0_72 = arith.constant 0 : index
    %c0_73 = arith.constant 0 : index
    %c0_74 = arith.constant 0 : index
    %150 = vector.load %arg16[%c0_72, %c0_73, %c0_74] : memref<2x8x32xf32, #tpu.memory_space<vmem>>, vector<2x8x32xf32>
    tpu.vector_store %arg16[%c0_72, %c0_73, %c0_74], %149 {strides = array<i32>} : memref<2x8x32xf32, #tpu.memory_space<vmem>>, vector<2x8x32xf32>,
    return
  }
}

</mosaic_0001>

<llo_original>
// kernel: tpu_custom_call.1
$region0: #{tpu_custom_call.1}
  #allocation0 [shape = 'u32[]', space=smem, size = 0x4, offset = 0x4, fixed_abs, tag = 'smem constant byte address 0x4 - core index']
  #allocation1 [shape = 'u32[144,128]{1,0:T(1,128)}', space=vmem, size = 0x12000, scoped, tag = 'internal scratch']
  %s0 = inlined_call_operand.hbm [shape: f32[2,8,32], index: 0, kind: input, shape index: {}]
  %s1 = inlined_call_operand.hbm [shape: s32[2,8,8], index: 1, kind: input, shape index: {}]
  %s2 = inlined_call_operand.vmem [shape: f32[32,32], index: 2, kind: input, shape index: {}]
  %s3 = inlined_call_operand.vmem [shape: f32[1,32], index: 3, kind: input, shape index: {}]
  %s4 = inlined_call_operand.vmem [shape: f32[32,32], index: 4, kind: input, shape index: {}]
  %s5 = inlined_call_operand.vmem [shape: f32[1,32], index: 5, kind: input, shape index: {}]
  %s6 = inlined_call_operand.vmem [shape: f32[32,32], index: 6, kind: input, shape index: {}]
  %s7 = inlined_call_operand.vmem [shape: f32[1,32], index: 7, kind: input, shape index: {}]
  %s8 = inlined_call_operand.hbm [shape: f32[32,32], index: 8, kind: input, shape index: {}]
  %s9 = inlined_call_operand.vmem [shape: f32[1,32], index: 9, kind: input, shape index: {}]
  %s10 = inlined_call_operand.vmem [shape: f32[1,32], index: 10, kind: input, shape index: {}]
  %s11 = inlined_call_operand.vmem [shape: f32[1,32], index: 11, kind: input, shape index: {}]
  %s12 = inlined_call_operand.hbm [shape: f32[32,64], index: 12, kind: input, shape index: {}]
  %s13 = inlined_call_operand.vmem [shape: f32[1,64], index: 13, kind: input, shape index: {}]
  %s14 = inlined_call_operand.vmem [shape: f32[64,32], index: 14, kind: input, shape index: {}]
  %s15 = inlined_call_operand.vmem [shape: f32[1,32], index: 15, kind: input, shape index: {}]
  %s16 = inlined_call_operand.hbm [shape: f32[2,8,32], index: 16, kind: output, shape index: {0}]
  %s17 = inlined_call_operand.hbm [shape: f32[2,4,8,8], index: 17, kind: output, shape index: {1}]
  %18 = xla_tuple %s16, %s17
  %s19 = sld [smem:[#allocation0]]
  $region98: #{tpu_custom_call.1} parent=0
    _
  %s21 = ssub.s32 1, %s19
  %s22 = scalar_select 0, %s21, %s19
  $region1: #{tpu_custom_call.1} parent=0
    #allocation2 [shape = 'u8[8192]{0}', space=vmem, size = 0x2000, scoped, tag = 'input window, operand 0, single buffered']
    #allocation3 [shape = 's32[1]{0}', space=sflag, size = 0x4, scoped, tag = 'scoped memory for tpu_custom_call.1']
    #allocation4 [shape = 's32[1]{0}', space=sflag, size = 0x4, scoped, tag = 'scoped memory for tpu_custom_call.1']
    #allocation5 [shape = 'u8[8192]{0}', space=vmem, size = 0x2000, scoped, tag = 'input window, operand 1, single buffered']
    #allocation6 [shape = 's32[1]{0}', space=sflag, size = 0x4, scoped, tag = 'scoped memory for tpu_custom_call.1']
    #allocation7 [shape = 'u8[16384]{0}', space=vmem, size = 0x4000, scoped, tag = 'input window, operand 8, single buffered']
    #allocation8 [shape = 'u8[16384]{0}', space=vmem, size = 0x4000, scoped, tag = 'input window, operand 12, single buffered']
    #allocation9 [shape = 's32[1]{0}', space=sflag, size = 0x4, scoped, tag = 'scoped memory for tpu_custom_call.1']
    #allocation10 [shape = 'u8[8192]{0}', space=vmem, size = 0x2000, scoped, tag = 'output window, operand 0, single buffered']
    #allocation11 [shape = 'u8[32768]{0}', space=vmem, size = 0x8000, scoped, tag = 'output window, operand 1, single buffered']
    #allocation12 [shape = 's32[1]{0}', space=sflag, size = 0x4, scoped, tag = 'scoped memory for tpu_custom_call.1']
    %23 = vsyncpa [#allocation3], 0
    %24 = vsyncpa [#allocation6], 0
    %25 = vsyncpa [#allocation9], 0
    %26 = vsyncpa [#allocation4], 0
    %27 = vsyncpa [#allocation12], 0
    // Predicated region
    $region2: #{tpu_custom_call.1} parent=1 // pred_check
      _
    $region3: #{tpu_custom_call.1} parent=1 // pred_check_branch
      %29 = sbr.rel (0) target = $region5
    $region4: #{tpu_custom_call.1} parent=1 // pred_region
      %s31 = ssub.s32 256, 256
      %32 = vsyncadd [#allocation3], %s31
      %s33 = sshll.u32 [#allocation2], 4
      %s34 = int_to_ptr.vmem [resolvable:$true] %s33
      %39 = dma.hbm_to_vmem [thread:$0]  %s0, 256, %s34, [#allocation3], 128, 128, 8
    $region5: #{tpu_custom_call.1} parent=1 // pred_fallthru
      _
    // Predicated region
    $region6: #{tpu_custom_call.1} parent=1 // pred_check
      _
    $region7: #{tpu_custom_call.1} parent=1 // pred_check_branch
      %41 = sbr.rel (0) target = $region9
    $region8: #{tpu_custom_call.1} parent=1 // pred_region
      %s43 = ssub.s32 256, 256
      %44 = vsyncadd [#allocation6], %s43
      %s45 = sshll.u32 [#allocation5], 4
      %s46 = int_to_ptr.vmem [resolvable:$true] %s45
      %51 = dma.hbm_to_vmem [thread:$0]  %s1, 256, %s46, [#allocation6], 128, 128, 8
    $region9: #{tpu_custom_call.1} parent=1 // pred_fallthru
      _
    // Predicated region
    $region10: #{tpu_custom_call.1} parent=1 // pred_check
      _
    $region11: #{tpu_custom_call.1} parent=1 // pred_check_branch
      %53 = sbr.rel (0) target = $region13
    $region12: #{tpu_custom_call.1} parent=1 // pred_region
      _
    $region13: #{tpu_custom_call.1} parent=1 // pred_fallthru
      _
    // Predicated region
    $region14: #{tpu_custom_call.1} parent=1 // pred_check
      _
    $region15: #{tpu_custom_call.1} parent=1 // pred_check_branch
      %55 = sbr.rel (0) target = $region17
    $region16: #{tpu_custom_call.1} parent=1 // pred_region
      _
    $region17: #{tpu_custom_call.1} parent=1 // pred_fallthru
      _
    // Predicated region
    $region18: #{tpu_custom_call.1} parent=1 // pred_check
      _
    $region19: #{tpu_custom_call.1} parent=1 // pred_check_branch
      %57 = sbr.rel (0) target = $region21
    $region20: #{tpu_custom_call.1} parent=1 // pred_region
      _
    $region21: #{tpu_custom_call.1} parent=1 // pred_fallthru
      _
    // Predicated region
    $region22: #{tpu_custom_call.1} parent=1 // pred_check
      _
    $region23: #{tpu_custom_call.1} parent=1 // pred_check_branch
      %59 = sbr.rel (0) target = $region25
    $region24: #{tpu_custom_call.1} parent=1 // pred_region
      _
    $region25: #{tpu_custom_call.1} parent=1 // pred_fallthru
      _
    // Predicated region
    $region26: #{tpu_custom_call.1} parent=1 // pred_check
      _
    $region27: #{tpu_custom_call.1} parent=1 // pred_check_branch
      %61 = sbr.rel (0) target = $region29
    $region28: #{tpu_custom_call.1} parent=1 // pred_region
      _
    $region29: #{tpu_custom_call.1} parent=1 // pred_fallthru
      _
    // Predicated region
    $region30: #{tpu_custom_call.1} parent=1 // pred_check
      _
    $region31: #{tpu_custom_call.1} parent=1 // pred_check_branch
      %63 = sbr.rel (0) target = $region33
    $region32: #{tpu_custom_call.1} parent=1 // pred_region
      _
    $region33: #{tpu_custom_call.1} parent=1 // pred_fallthru
      _
    // Predicated region
    $region34: #{tpu_custom_call.1} parent=1 // pred_check
      _
    $region35: #{tpu_custom_call.1} parent=1 // pred_check_branch
      %65 = sbr.rel (0) target = $region37
    $region36: #{tpu_custom_call.1} parent=1 // pred_region
      %s67 = ssub.s32 512, 512
      %68 = vsyncadd [#allocation6], %s67
      %s69 = sshll.u32 [#allocation7], 4
      %s70 = int_to_ptr.vmem [resolvable:$true] %s69
      %75 = dma.hbm_to_vmem [thread:$0]  %s8, 512, %s70, [#allocation6], 128, 128, 8
    $region37: #{tpu_custom_call.1} parent=1 // pred_fallthru
      _
    // Predicated region
    $region38: #{tpu_custom_call.1} parent=1 // pred_check
      _
    $region39: #{tpu_custom_call.1} parent=1 // pred_check_branch
      %77 = sbr.rel (0) target = $region41
    $region40: #{tpu_custom_call.1} parent=1 // pred_region
      _
    $region41: #{tpu_custom_call.1} parent=1 // pred_fallthru
      _
    // Predicated region
    $region42: #{tpu_custom_call.1} parent=1 // pred_check
      _
    $region43: #{tpu_custom_call.1} parent=1 // pred_check_branch
      %79 = sbr.rel (0) target = $region45
    $region44: #{tpu_custom_call.1} parent=1 // pred_region
      _
    $region45: #{tpu_custom_call.1} parent=1 // pred_fallthru
      _
    // Predicated region
    $region46: #{tpu_custom_call.1} parent=1 // pred_check
      _
    $region47: #{tpu_custom_call.1} parent=1 // pred_check_branch
      %81 = sbr.rel (0) target = $region49
    $region48: #{tpu_custom_call.1} parent=1 // pred_region
      _
    $region49: #{tpu_custom_call.1} parent=1 // pred_fallthru
      _
    // Predicated region
    $region50: #{tpu_custom_call.1} parent=1 // pred_check
      _
    $region51: #{tpu_custom_call.1} parent=1 // pred_check_branch
      %83 = sbr.rel (0) target = $region53
    $region52: #{tpu_custom_call.1} parent=1 // pred_region
      %s85 = ssub.s32 512, 512
      %86 = vsyncadd [#allocation9], %s85
      %s87 = sshll.u32 [#allocation8], 4
      %s88 = int_to_ptr.vmem [resolvable:$true] %s87
      %93 = dma.hbm_to_vmem [thread:$0]  %s12, 512, %s88, [#allocation9], 128, 128, 8
    $region53: #{tpu_custom_call.1} parent=1 // pred_fallthru
      _
    // Predicated region
    $region54: #{tpu_custom_call.1} parent=1 // pred_check
      _
    $region55: #{tpu_custom_call.1} parent=1 // pred_check_branch
      %95 = sbr.rel (0) target = $region57
    $region56: #{tpu_custom_call.1} parent=1 // pred_region
      _
    $region57: #{tpu_custom_call.1} parent=1 // pred_fallthru
      _
    // Predicated region
    $region58: #{tpu_custom_call.1} parent=1 // pred_check
      _
    $region59: #{tpu_custom_call.1} parent=1 // pred_check_branch
      %97 = sbr.rel (0) target = $region61
    $region60: #{tpu_custom_call.1} parent=1 // pred_region
      _
    $region61: #{tpu_custom_call.1} parent=1 // pred_fallthru
      _
    // Predicated region
    $region62: #{tpu_custom_call.1} parent=1 // pred_check
      _
    $region63: #{tpu_custom_call.1} parent=1 // pred_check_branch
      %99 = sbr.rel (0) target = $region65
    $region64: #{tpu_custom_call.1} parent=1 // pred_region
      _
    $region65: #{tpu_custom_call.1} parent=1 // pred_fallthru
      _
    // Predicated region
    $region66: #{tpu_custom_call.1} parent=1 // pred_check
      _
    $region67: #{tpu_custom_call.1} parent=1 // pred_check_branch
      %101 = sbr.rel (0) target = $region69
    $region68: #{tpu_custom_call.1} parent=1 // pred_region
      %102 = dma.done [#allocation3], 256
    $region69: #{tpu_custom_call.1} parent=1 // pred_fallthru
      _
    // Predicated region
    $region70: #{tpu_custom_call.1} parent=1 // pred_check
      _
    $region71: #{tpu_custom_call.1} parent=1 // pred_check_branch
      %104 = sbr.rel (0) target = $region73
    $region72: #{tpu_custom_call.1} parent=1 // pred_region
      %105 = dma.done [#allocation6], 256
    $region73: #{tpu_custom_call.1} parent=1 // pred_fallthru
      _
    // Predicated region
    $region74: #{tpu_custom_call.1} parent=1 // pred_check
      _
    $region75: #{tpu_custom_call.1} parent=1 // pred_check_branch
      %107 = sbr.rel (0) target = $region77
    $region76: #{tpu_custom_call.1} parent=1 // pred_region
      %108 = dma.done [#allocation6], 512
    $region77: #{tpu_custom_call.1} parent=1 // pred_fallthru
      _
    // Predicated region
    $region78: #{tpu_custom_call.1} parent=1 // pred_check
      _
    $region79: #{tpu_custom_call.1} parent=1 // pred_check_branch
      %110 = sbr.rel (0) target = $region81
    $region80: #{tpu_custom_call.1} parent=1 // pred_region
      %111 = dma.done [#allocation9], 512
    $region81: #{tpu_custom_call.1} parent=1 // pred_fallthru
      _
    %v112 = vld [vmem:[#allocation2] sm:$0xff]
    %v113 = vld [vmem:[#allocation2 + $0x8] sm:$0xff]
    %v114 = vld [vmem:[%s2] sm:$0xff]
    %v115 = vld [vmem:[%s2 + $0x8] sm:$0xff]
    %v116 = vld [vmem:[%s2 + $0x10] sm:$0xff]
    %v117 = vld [vmem:[%s2 + $0x18] sm:$0xff]
    %v118 = vld [vmem:[%s3] sm:$0x1]
    %v120 = vlaneseq
    %v121 = vshrl.u32 %v120, 7
    %v122 = vsub.s32 0, %v121
    %v123 = vrot.slane %v118, %v122
    %vm125 = vcmask 261120
    %v127 = vsel %vm125, %v112, 0
    %v130 = vsel %vm125, %v113, 0
    %132 = vmatprep.subr.mxu0 0.0
    %133 = vmatpush1.msra.mxu0 0.0
    %134 = vmatprep.subr.mxu0 0.0
    %135 = vmatpush1.msra.mxu0 0.0
    %136 = vmatprep.subr.mxu0 0.0
    %137 = vmatpush1.msra.mxu0 0.0
    %138 = vmatprep.subr.mxu0 0.0
    %139 = vmatpush1.msra.mxu0 0.0
    %140 = vmatprep.subr.mxu0 0.0
    %141 = vmatpush1.msra.mxu0 0.0
    %142 = vmatprep.subr.mxu0 0.0
    %143 = vmatpush1.msra.mxu0 0.0
    %144 = vmatprep.subr.mxu0 0.0
    %145 = vmatpush1.msra.mxu0 0.0
    %146 = vmatprep.subr.mxu0 0.0
    %147 = vmatpush1.msra.mxu0 0.0
    %148 = vmatprep.subr.mxu0 0.0
    %149 = vmatpush1.msra.mxu0 0.0
    %150 = vmatprep.subr.mxu0 0.0
    %151 = vmatpush1.msra.mxu0 0.0
    %152 = vmatprep.subr.mxu0 0.0
    %153 = vmatpush1.msra.mxu0 0.0
    %154 = vmatprep.subr.mxu0 0.0
    %155 = vmatpush1.msra.mxu0 0.0
    %156 = vmatprep.subr.mxu0 0.0
    %157 = vmatpush1.msra.mxu0 %v117
    %158 = vmatprep.subr.mxu0 0.0
    %159 = vmatpush1.msra.mxu0 %v116
    %160 = vmatprep.subr.mxu0 0.0
    %161 = vmatpush1.msra.mxu0 %v115
    %162 = vmatprep.subr.mxu0 0.0
    %163 = vmatpush1.msra.mxu0 %v114
    %164 = vmatprep.subr.mxu0 0.0
    %165 = vmatpush2.msra.mxu0 0.0
    %166 = vmatprep.subr.mxu0 0.0
    %167 = vmatpush2.msra.mxu0 0.0
    %168 = vmatprep.subr.mxu0 0.0
    %169 = vmatpush2.msra.mxu0 0.0
    %170 = vmatprep.subr.mxu0 0.0
    %171 = vmatpush2.msra.mxu0 0.0
    %172 = vmatprep.subr.mxu0 0.0
    %173 = vmatpush2.msra.mxu0 0.0
    %174 = vmatprep.subr.mxu0 0.0
    %175 = vmatpush2.msra.mxu0 0.0
    %176 = vmatprep.subr.mxu0 0.0
    %177 = vmatpush2.msra.mxu0 0.0
    %178 = vmatprep.subr.mxu0 0.0
    %179 = vmatpush2.msra.mxu0 0.0
    %180 = vmatprep.subr.mxu0 0.0
    %181 = vmatpush2.msra.mxu0 0.0
    %182 = vmatprep.subr.mxu0 0.0
    %183 = vmatpush2.msra.mxu0 0.0
    %184 = vmatprep.subr.mxu0 0.0
    %185 = vmatpush2.msra.mxu0 0.0
    %186 = vmatprep.subr.mxu0 0.0
    %187 = vmatpush2.msra.mxu0 0.0
    %188 = vmatprep.subr.mxu0 0.0
    %189 = vmatpush2.msra.mxu0 0.0
    %190 = vmatprep.subr.mxu0 0.0
    %191 = vmatpush2.msra.mxu0 0.0
    %192 = vmatprep.subr.mxu0 0.0
    %193 = vmatpush2.msra.mxu0 0.0
    %194 = vmatprep.subr.mxu0 0.0
    %195 = vmatpush2.msra.mxu0 0.0
    %196 = vmatprep.mubr.f32.mxu0 0.0
    %197 = vmatmul.mubr.f32.gmra.mxu0 %v127
    %v198 = vpop.f32.mrf.mxu0
    %v199 = vadd.f32 %v123, %v198
    %v200 = vpop.f32.mrf.mxu0
    %201 = vmatprep.mubr.f32.mxu0 0.0
    %202 = vmatmul.mubr.f32.gmra.mxu0 %v130
    %v203 = vpop.f32.mrf.mxu0
    %v204 = vadd.f32 %v123, %v203
    %v205 = vpop.f32.mrf.mxu0
    %206 = vdwg.mxu0
    %v207 = vld [vmem:[%s4] sm:$0xff]
    %v208 = vld [vmem:[%s4 + $0x8] sm:$0xff]
    %v209 = vld [vmem:[%s4 + $0x10] sm:$0xff]
    %v210 = vld [vmem:[%s4 + $0x18] sm:$0xff]
    %v211 = vld [vmem:[%s5] sm:$0x1]
    %v213 = vlaneseq
    %v214 = vshrl.u32 %v213, 7
    %v215 = vsub.s32 0, %v214
    %v216 = vrot.slane %v211, %v215
    %218 = vmatprep.subr.mxu0 0.0
    %219 = vmatpush1.msra.mxu0 0.0
    %220 = vmatprep.subr.mxu0 0.0
    %221 = vmatpush1.msra.mxu0 0.0
    %222 = vmatprep.subr.mxu0 0.0
    %223 = vmatpush1.msra.mxu0 0.0
    %224 = vmatprep.subr.mxu0 0.0
    %225 = vmatpush1.msra.mxu0 0.0
    %226 = vmatprep.subr.mxu0 0.0
    %227 = vmatpush1.msra.mxu0 0.0
    %228 = vmatprep.subr.mxu0 0.0
    %229 = vmatpush1.msra.mxu0 0.0
    %230 = vmatprep.subr.mxu0 0.0
    %231 = vmatpush1.msra.mxu0 0.0
    %232 = vmatprep.subr.mxu0 0.0
    %233 = vmatpush1.msra.mxu0 0.0
    %234 = vmatprep.subr.mxu0 0.0
    %235 = vmatpush1.msra.mxu0 0.0
    %236 = vmatprep.subr.mxu0 0.0
    %237 = vmatpush1.msra.mxu0 0.0
    %238 = vmatprep.subr.mxu0 0.0
    %239 = vmatpush1.msra.mxu0 0.0
    %240 = vmatprep.subr.mxu0 0.0
    %241 = vmatpush1.msra.mxu0 0.0
    %242 = vmatprep.subr.mxu0 0.0
    %243 = vmatpush1.msra.mxu0 %v210
    %244 = vmatprep.subr.mxu0 0.0
    %245 = vmatpush1.msra.mxu0 %v209
    %246 = vmatprep.subr.mxu0 0.0
    %247 = vmatpush1.msra.mxu0 %v208
    %248 = vmatprep.subr.mxu0 0.0
    %249 = vmatpush1.msra.mxu0 %v207
    %250 = vmatprep.subr.mxu0 0.0
    %251 = vmatpush2.msra.mxu0 0.0
    %252 = vmatprep.subr.mxu0 0.0
    %253 = vmatpush2.msra.mxu0 0.0
    %254 = vmatprep.subr.mxu0 0.0
    %255 = vmatpush2.msra.mxu0 0.0
    %256 = vmatprep.subr.mxu0 0.0
    %257 = vmatpush2.msra.mxu0 0.0
    %258 = vmatprep.subr.mxu0 0.0
    %259 = vmatpush2.msra.mxu0 0.0
    %260 = vmatprep.subr.mxu0 0.0
    %261 = vmatpush2.msra.mxu0 0.0
    %262 = vmatprep.subr.mxu0 0.0
    %263 = vmatpush2.msra.mxu0 0.0
    %264 = vmatprep.subr.mxu0 0.0
    %265 = vmatpush2.msra.mxu0 0.0
    %266 = vmatprep.subr.mxu0 0.0
    %267 = vmatpush2.msra.mxu0 0.0
    %268 = vmatprep.subr.mxu0 0.0
    %269 = vmatpush2.msra.mxu0 0.0
    %270 = vmatprep.subr.mxu0 0.0
    %271 = vmatpush2.msra.mxu0 0.0
    %272 = vmatprep.subr.mxu0 0.0
    %273 = vmatpush2.msra.mxu0 0.0
    %274 = vmatprep.subr.mxu0 0.0
    %275 = vmatpush2.msra.mxu0 0.0
    %276 = vmatprep.subr.mxu0 0.0
    %277 = vmatpush2.msra.mxu0 0.0
    %278 = vmatprep.subr.mxu0 0.0
    %279 = vmatpush2.msra.mxu0 0.0
    %280 = vmatprep.subr.mxu0 0.0
    %281 = vmatpush2.msra.mxu0 0.0
    %282 = vmatprep.mubr.f32.mxu0 0.0
    %283 = vmatmul.mubr.f32.gmra.mxu0 %v127
    %v284 = vpop.f32.mrf.mxu0
    %v285 = vadd.f32 %v216, %v284
    %v286 = vpop.f32.mrf.mxu0
    %287 = vmatprep.mubr.f32.mxu0 0.0
    %288 = vmatmul.mubr.f32.gmra.mxu0 %v130
    %v289 = vpop.f32.mrf.mxu0
    %v290 = vadd.f32 %v216, %v289
    %v291 = vpop.f32.mrf.mxu0
    %292 = vdwg.mxu0
    %v293 = vld [vmem:[%s6] sm:$0xff]
    %v294 = vld [vmem:[%s6 + $0x8] sm:$0xff]
    %v295 = vld [vmem:[%s6 + $0x10] sm:$0xff]
    %v296 = vld [vmem:[%s6 + $0x18] sm:$0xff]
    %v297 = vld [vmem:[%s7] sm:$0x1]
    %v299 = vlaneseq
    %v300 = vshrl.u32 %v299, 7
    %v301 = vsub.s32 0, %v300
    %v302 = vrot.slane %v297, %v301
    %304 = vmatprep.subr.mxu0 0.0
    %305 = vmatpush1.msra.mxu0 0.0
    %306 = vmatprep.subr.mxu0 0.0
    %307 = vmatpush1.msra.mxu0 0.0
    %308 = vmatprep.subr.mxu0 0.0
    %309 = vmatpush1.msra.mxu0 0.0
    %310 = vmatprep.subr.mxu0 0.0
    %311 = vmatpush1.msra.mxu0 0.0
    %312 = vmatprep.subr.mxu0 0.0
    %313 = vmatpush1.msra.mxu0 0.0
    %314 = vmatprep.subr.mxu0 0.0
    %315 = vmatpush1.msra.mxu0 0.0
    %316 = vmatprep.subr.mxu0 0.0
    %317 = vmatpush1.msra.mxu0 0.0
    %318 = vmatprep.subr.mxu0 0.0
    %319 = vmatpush1.msra.mxu0 0.0
    %320 = vmatprep.subr.mxu0 0.0
    %321 = vmatpush1.msra.mxu0 0.0
    %322 = vmatprep.subr.mxu0 0.0
    %323 = vmatpush1.msra.mxu0 0.0
    %324 = vmatprep.subr.mxu0 0.0
    %325 = vmatpush1.msra.mxu0 0.0
    %326 = vmatprep.subr.mxu0 0.0
    %327 = vmatpush1.msra.mxu0 0.0
    %328 = vmatprep.subr.mxu0 0.0
    %329 = vmatpush1.msra.mxu0 %v296
    %330 = vmatprep.subr.mxu0 0.0
    %331 = vmatpush1.msra.mxu0 %v295
    %332 = vmatprep.subr.mxu0 0.0
    %333 = vmatpush1.msra.mxu0 %v294
    %334 = vmatprep.subr.mxu0 0.0
    %335 = vmatpush1.msra.mxu0 %v293
    %336 = vmatprep.subr.mxu0 0.0
    %337 = vmatpush2.msra.mxu0 0.0
    %338 = vmatprep.subr.mxu0 0.0
    %339 = vmatpush2.msra.mxu0 0.0
    %340 = vmatprep.subr.mxu0 0.0
    %341 = vmatpush2.msra.mxu0 0.0
    %342 = vmatprep.subr.mxu0 0.0
    %343 = vmatpush2.msra.mxu0 0.0
    %344 = vmatprep.subr.mxu0 0.0
    %345 = vmatpush2.msra.mxu0 0.0
    %346 = vmatprep.subr.mxu0 0.0
    %347 = vmatpush2.msra.mxu0 0.0
    %348 = vmatprep.subr.mxu0 0.0
    %349 = vmatpush2.msra.mxu0 0.0
    %350 = vmatprep.subr.mxu0 0.0
    %351 = vmatpush2.msra.mxu0 0.0
    %352 = vmatprep.subr.mxu0 0.0
    %353 = vmatpush2.msra.mxu0 0.0
    %354 = vmatprep.subr.mxu0 0.0
    %355 = vmatpush2.msra.mxu0 0.0
    %356 = vmatprep.subr.mxu0 0.0
    %357 = vmatpush2.msra.mxu0 0.0
    %358 = vmatprep.subr.mxu0 0.0
    %359 = vmatpush2.msra.mxu0 0.0
    %360 = vmatprep.subr.mxu0 0.0
    %361 = vmatpush2.msra.mxu0 0.0
    %362 = vmatprep.subr.mxu0 0.0
    %363 = vmatpush2.msra.mxu0 0.0
    %364 = vmatprep.subr.mxu0 0.0
    %365 = vmatpush2.msra.mxu0 0.0
    %366 = vmatprep.subr.mxu0 0.0
    %367 = vmatpush2.msra.mxu0 0.0
    %368 = vmatprep.mubr.f32.mxu0 0.0
    %369 = vmatmul.mubr.f32.gmra.mxu0 %v127
    %v370 = vpop.f32.mrf.mxu0
    %v371 = vadd.f32 %v302, %v370
    %v372 = vpop.f32.mrf.mxu0
    %373 = vmatprep.mubr.f32.mxu0 0.0
    %374 = vmatmul.mubr.f32.gmra.mxu0 %v130
    %v375 = vpop.f32.mrf.mxu0
    %v376 = vadd.f32 %v302, %v375
    %v377 = vpop.f32.mrf.mxu0
    %378 = vdwg.mxu0
    %379 = vxpose.xlu0.b32.start [1/16] %v199, 128
    %380 = vxpose.xlu0.b32.cont [2/16] %v204, 128
    %381 = vxpose.xlu0.b32.cont [3/16] 0.0, 128
    %382 = vxpose.xlu0.b32.cont [4/16] 0.0, 128
    %383 = vxpose.xlu0.b32.cont [5/16] 0.0, 128
    %384 = vxpose.xlu0.b32.cont [6/16] 0.0, 128
    %385 = vxpose.xlu0.b32.cont [7/16] 0.0, 128
    %386 = vxpose.xlu0.b32.cont [8/16] 0.0, 128
    %387 = vxpose.xlu0.b32.cont [9/16] 0.0, 128
    %388 = vxpose.xlu0.b32.cont [10/16] 0.0, 128
    %389 = vxpose.xlu0.b32.cont [11/16] 0.0, 128
    %390 = vxpose.xlu0.b32.cont [12/16] 0.0, 128
    %391 = vxpose.xlu0.b32.cont [13/16] 0.0, 128
    %392 = vxpose.xlu0.b32.cont [14/16] 0.0, 128
    %393 = vxpose.xlu0.b32.cont [15/16] 0.0, 128
    %394 = vxpose.xlu0.b32.end [16/16] 0.0, 128
    %v395 = vpop.trf.xlu0
    %v396 = vpop.trf.xlu0
    %v397 = vpop.trf.xlu0
    %v398 = vpop.trf.xlu0
    %v399 = vpop.trf.xlu0
    %v400 = vpop.trf.xlu0
    %v401 = vpop.trf.xlu0
    %v402 = vpop.trf.xlu0
    %v403 = vpop.trf.xlu0
    %v404 = vpop.trf.xlu0
    %v405 = vpop.trf.xlu0
    %v406 = vpop.trf.xlu0
    %v407 = vpop.trf.xlu0
    %v408 = vpop.trf.xlu0
    %v409 = vpop.trf.xlu0
    %v410 = vpop.trf.xlu0
    %411 = vxpose.xlu0.b32.start [1/16] %v395, 128
    %412 = vxpose.xlu0.b32.cont [2/16] 0.0, 128
    %413 = vxpose.xlu0.b32.cont [3/16] 0.0, 128
    %414 = vxpose.xlu0.b32.cont [4/16] 0.0, 128
    %415 = vxpose.xlu0.b32.cont [5/16] 0.0, 128
    %416 = vxpose.xlu0.b32.cont [6/16] 0.0, 128
    %417 = vxpose.xlu0.b32.cont [7/16] 0.0, 128
    %418 = vxpose.xlu0.b32.cont [8/16] 0.0, 128
    %419 = vxpose.xlu0.b32.cont [9/16] 0.0, 128
    %420 = vxpose.xlu0.b32.cont [10/16] 0.0, 128
    %421 = vxpose.xlu0.b32.cont [11/16] 0.0, 128
    %422 = vxpose.xlu0.b32.cont [12/16] 0.0, 128
    %423 = vxpose.xlu0.b32.cont [13/16] 0.0, 128
    %424 = vxpose.xlu0.b32.cont [14/16] 0.0, 128
    %425 = vxpose.xlu0.b32.cont [15/16] 0.0, 128
    %426 = vxpose.xlu0.b32.end [16/16] 0.0, 128
    %v427 = vpop.trf.xlu0
    %v428 = vpop.trf.xlu0
    %v429 = vpop.trf.xlu0
    %v430 = vpop.trf.xlu0
    %v431 = vpop.trf.xlu0
    %v432 = vpop.trf.xlu0
    %v433 = vpop.trf.xlu0
    %v434 = vpop.trf.xlu0
    %v435 = vpop.trf.xlu0
    %v436 = vpop.trf.xlu0
    %v437 = vpop.trf.xlu0
    %v438 = vpop.trf.xlu0
    %v439 = vpop.trf.xlu0
    %v440 = vpop.trf.xlu0
    %v441 = vpop.trf.xlu0
    %v442 = vpop.trf.xlu0
    %443 = vxpose.xlu0.b32.start [1/16] %v396, 128
    %444 = vxpose.xlu0.b32.cont [2/16] 0.0, 128
    %445 = vxpose.xlu0.b32.cont [3/16] 0.0, 128
    %446 = vxpose.xlu0.b32.cont [4/16] 0.0, 128
    %447 = vxpose.xlu0.b32.cont [5/16] 0.0, 128
    %448 = vxpose.xlu0.b32.cont [6/16] 0.0, 128
    %449 = vxpose.xlu0.b32.cont [7/16] 0.0, 128
    %450 = vxpose.xlu0.b32.cont [8/16] 0.0, 128
    %451 = vxpose.xlu0.b32.cont [9/16] 0.0, 128
    %452 = vxpose.xlu0.b32.cont [10/16] 0.0, 128
    %453 = vxpose.xlu0.b32.cont [11/16] 0.0, 128
    %454 = vxpose.xlu0.b32.cont [12/16] 0.0, 128
    %455 = vxpose.xlu0.b32.cont [13/16] 0.0, 128
    %456 = vxpose.xlu0.b32.cont [14/16] 0.0, 128
    %457 = vxpose.xlu0.b32.cont [15/16] 0.0, 128
    %458 = vxpose.xlu0.b32.end [16/16] 0.0, 128
    %v459 = vpop.trf.xlu0
    %v460 = vpop.trf.xlu0
    %v461 = vpop.trf.xlu0
    %v462 = vpop.trf.xlu0
    %v463 = vpop.trf.xlu0
    %v464 = vpop.trf.xlu0
    %v465 = vpop.trf.xlu0
    %v466 = vpop.trf.xlu0
    %v467 = vpop.trf.xlu0
    %v468 = vpop.trf.xlu0
    %v469 = vpop.trf.xlu0
    %v470 = vpop.trf.xlu0
    %v471 = vpop.trf.xlu0
    %v472 = vpop.trf.xlu0
    %v473 = vpop.trf.xlu0
    %v474 = vpop.trf.xlu0
    %475 = vxpose.xlu0.b32.start [1/16] %v397, 128
    %476 = vxpose.xlu0.b32.cont [2/16] 0.0, 128
    %477 = vxpose.xlu0.b32.cont [3/16] 0.0, 128
    %478 = vxpose.xlu0.b32.cont [4/16] 0.0, 128
    %479 = vxpose.xlu0.b32.cont [5/16] 0.0, 128
    %480 = vxpose.xlu0.b32.cont [6/16] 0.0, 128
    %481 = vxpose.xlu0.b32.cont [7/16] 0.0, 128
    %482 = vxpose.xlu0.b32.cont [8/16] 0.0, 128
    %483 = vxpose.xlu0.b32.cont [9/16] 0.0, 128
    %484 = vxpose.xlu0.b32.cont [10/16] 0.0, 128
    %485 = vxpose.xlu0.b32.cont [11/16] 0.0, 128
    %486 = vxpose.xlu0.b32.cont [12/16] 0.0, 128
    %487 = vxpose.xlu0.b32.cont [13/16] 0.0, 128
    %488 = vxpose.xlu0.b32.cont [14/16] 0.0, 128
    %489 = vxpose.xlu0.b32.cont [15/16] 0.0, 128
    %490 = vxpose.xlu0.b32.end [16/16] 0.0, 128
    %v491 = vpop.trf.xlu0
    %v492 = vpop.trf.xlu0
    %v493 = vpop.trf.xlu0
    %v494 = vpop.trf.xlu0
    %v495 = vpop.trf.xlu0
    %v496 = vpop.trf.xlu0
    %v497 = vpop.trf.xlu0
    %v498 = vpop.trf.xlu0
    %v499 = vpop.trf.xlu0
    %v500 = vpop.trf.xlu0
    %v501 = vpop.trf.xlu0
    %v502 = vpop.trf.xlu0
    %v503 = vpop.trf.xlu0
    %v504 = vpop.trf.xlu0
    %v505 = vpop.trf.xlu0
    %v506 = vpop.trf.xlu0
    %507 = vxpose.xlu0.b32.start [1/16] %v398, 128
    %508 = vxpose.xlu0.b32.cont [2/16] 0.0, 128
    %509 = vxpose.xlu0.b32.cont [3/16] 0.0, 128
    %510 = vxpose.xlu0.b32.cont [4/16] 0.0, 128
    %511 = vxpose.xlu0.b32.cont [5/16] 0.0, 128
    %512 = vxpose.xlu0.b32.cont [6/16] 0.0, 128
    %513 = vxpose.xlu0.b32.cont [7/16] 0.0, 128
    %514 = vxpose.xlu0.b32.cont [8/16] 0.0, 128
    %515 = vxpose.xlu0.b32.cont [9/16] 0.0, 128
    %516 = vxpose.xlu0.b32.cont [10/16] 0.0, 128
    %517 = vxpose.xlu0.b32.cont [11/16] 0.0, 128
    %518 = vxpose.xlu0.b32.cont [12/16] 0.0, 128
    %519 = vxpose.xlu0.b32.cont [13/16] 0.0, 128
    %520 = vxpose.xlu0.b32.cont [14/16] 0.0, 128
    %521 = vxpose.xlu0.b32.cont [15/16] 0.0, 128
    %522 = vxpose.xlu0.b32.end [16/16] 0.0, 128
    %v523 = vpop.trf.xlu0
    %v524 = vpop.trf.xlu0
    %v525 = vpop.trf.xlu0
    %v526 = vpop.trf.xlu0
    %v527 = vpop.trf.xlu0
    %v528 = vpop.trf.xlu0
    %v529 = vpop.trf.xlu0
    %v530 = vpop.trf.xlu0
    %v531 = vpop.trf.xlu0
    %v532 = vpop.trf.xlu0
    %v533 = vpop.trf.xlu0
    %v534 = vpop.trf.xlu0
    %v535 = vpop.trf.xlu0
    %v536 = vpop.trf.xlu0
    %v537 = vpop.trf.xlu0
    %v538 = vpop.trf.xlu0
    %539 = vxpose.xlu0.b32.start [1/16] %v285, 128
    %540 = vxpose.xlu0.b32.cont [2/16] %v290, 128
    %541 = vxpose.xlu0.b32.cont [3/16] 0.0, 128
    %542 = vxpose.xlu0.b32.cont [4/16] 0.0, 128
    %543 = vxpose.xlu0.b32.cont [5/16] 0.0, 128
    %544 = vxpose.xlu0.b32.cont [6/16] 0.0, 128
    %545 = vxpose.xlu0.b32.cont [7/16] 0.0, 128
    %546 = vxpose.xlu0.b32.cont [8/16] 0.0, 128
    %547 = vxpose.xlu0.b32.cont [9/16] 0.0, 128
    %548 = vxpose.xlu0.b32.cont [10/16] 0.0, 128
    %549 = vxpose.xlu0.b32.cont [11/16] 0.0, 128
    %550 = vxpose.xlu0.b32.cont [12/16] 0.0, 128
    %551 = vxpose.xlu0.b32.cont [13/16] 0.0, 128
    %552 = vxpose.xlu0.b32.cont [14/16] 0.0, 128
    %553 = vxpose.xlu0.b32.cont [15/16] 0.0, 128
    %554 = vxpose.xlu0.b32.end [16/16] 0.0, 128
    %v555 = vpop.trf.xlu0
    %v556 = vpop.trf.xlu0
    %v557 = vpop.trf.xlu0
    %v558 = vpop.trf.xlu0
    %v559 = vpop.trf.xlu0
    %v560 = vpop.trf.xlu0
    %v561 = vpop.trf.xlu0
    %v562 = vpop.trf.xlu0
    %v563 = vpop.trf.xlu0
    %v564 = vpop.trf.xlu0
    %v565 = vpop.trf.xlu0
    %v566 = vpop.trf.xlu0
    %v567 = vpop.trf.xlu0
    %v568 = vpop.trf.xlu0
    %v569 = vpop.trf.xlu0
    %v570 = vpop.trf.xlu0
    %571 = vxpose.xlu0.b32.start [1/16] %v371, 128
    %572 = vxpose.xlu0.b32.cont [2/16] %v376, 128
    %573 = vxpose.xlu0.b32.cont [3/16] 0.0, 128
    %574 = vxpose.xlu0.b32.cont [4/16] 0.0, 128
    %575 = vxpose.xlu0.b32.cont [5/16] 0.0, 128
    %576 = vxpose.xlu0.b32.cont [6/16] 0.0, 128
    %577 = vxpose.xlu0.b32.cont [7/16] 0.0, 128
    %578 = vxpose.xlu0.b32.cont [8/16] 0.0, 128
    %579 = vxpose.xlu0.b32.cont [9/16] 0.0, 128
    %580 = vxpose.xlu0.b32.cont [10/16] 0.0, 128
    %581 = vxpose.xlu0.b32.cont [11/16] 0.0, 128
    %582 = vxpose.xlu0.b32.cont [12/16] 0.0, 128
    %583 = vxpose.xlu0.b32.cont [13/16] 0.0, 128
    %584 = vxpose.xlu0.b32.cont [14/16] 0.0, 128
    %585 = vxpose.xlu0.b32.cont [15/16] 0.0, 128
    %586 = vxpose.xlu0.b32.end [16/16] 0.0, 128
    %v587 = vpop.trf.xlu0
    %v588 = vpop.trf.xlu0
    %v589 = vpop.trf.xlu0
    %v590 = vpop.trf.xlu0
    %v591 = vpop.trf.xlu0
    %v592 = vpop.trf.xlu0
    %v593 = vpop.trf.xlu0
    %v594 = vpop.trf.xlu0
    %v595 = vpop.trf.xlu0
    %v596 = vpop.trf.xlu0
    %v597 = vpop.trf.xlu0
    %v598 = vpop.trf.xlu0
    %v599 = vpop.trf.xlu0
    %v600 = vpop.trf.xlu0
    %v601 = vpop.trf.xlu0
    %v602 = vpop.trf.xlu0
    %vm603 = vcmask 64512
    %v605 = vsel %vm603, %v427, 0
    %607 = vmatprep.subr.mxu0 0.0
    %608 = vmatpush1.msra.mxu0 0.0
    %609 = vmatprep.subr.mxu0 0.0
    %610 = vmatpush1.msra.mxu0 0.0
    %611 = vmatprep.subr.mxu0 0.0
    %612 = vmatpush1.msra.mxu0 0.0
    %613 = vmatprep.subr.mxu0 0.0
    %614 = vmatpush1.msra.mxu0 0.0
    %615 = vmatprep.subr.mxu0 0.0
    %616 = vmatpush1.msra.mxu0 0.0
    %617 = vmatprep.subr.mxu0 0.0
    %618 = vmatpush1.msra.mxu0 0.0
    %619 = vmatprep.subr.mxu0 0.0
    %620 = vmatpush1.msra.mxu0 0.0
    %621 = vmatprep.subr.mxu0 0.0
    %622 = vmatpush1.msra.mxu0 0.0
    %623 = vmatprep.subr.mxu0 0.0
    %624 = vmatpush1.msra.mxu0 0.0
    %625 = vmatprep.subr.mxu0 0.0
    %626 = vmatpush1.msra.mxu0 0.0
    %627 = vmatprep.subr.mxu0 0.0
    %628 = vmatpush1.msra.mxu0 0.0
    %629 = vmatprep.subr.mxu0 0.0
    %630 = vmatpush1.msra.mxu0 0.0
    %631 = vmatprep.subr.mxu0 0.0
    %632 = vmatpush1.msra.mxu0 0.0
    %633 = vmatprep.subr.mxu0 0.0
    %634 = vmatpush1.msra.mxu0 0.0
    %635 = vmatprep.subr.mxu0 0.0
    %636 = vmatpush1.msra.mxu0 0.0
    %637 = vmatprep.subr.mxu0 0.0
    %638 = vmatpush1.msra.mxu0 %v555
    %639 = vmatprep.subr.mxu0 0.0
    %640 = vmatpush2.msra.mxu0 0.0
    %641 = vmatprep.subr.mxu0 0.0
    %642 = vmatpush2.msra.mxu0 0.0
    %643 = vmatprep.subr.mxu0 0.0
    %644 = vmatpush2.msra.mxu0 0.0
    %645 = vmatprep.subr.mxu0 0.0
    %646 = vmatpush2.msra.mxu0 0.0
    %647 = vmatprep.subr.mxu0 0.0
    %648 = vmatpush2.msra.mxu0 0.0
    %649 = vmatprep.subr.mxu0 0.0
    %650 = vmatpush2.msra.mxu0 0.0
    %651 = vmatprep.subr.mxu0 0.0
    %652 = vmatpush2.msra.mxu0 0.0
    %653 = vmatprep.subr.mxu0 0.0
    %654 = vmatpush2.msra.mxu0 0.0
    %655 = vmatprep.subr.mxu0 0.0
    %656 = vmatpush2.msra.mxu0 0.0
    %657 = vmatprep.subr.mxu0 0.0
    %658 = vmatpush2.msra.mxu0 0.0
    %659 = vmatprep.subr.mxu0 0.0
    %660 = vmatpush2.msra.mxu0 0.0
    %661 = vmatprep.subr.mxu0 0.0
    %662 = vmatpush2.msra.mxu0 0.0
    %663 = vmatprep.subr.mxu0 0.0
    %664 = vmatpush2.msra.mxu0 0.0
    %665 = vmatprep.subr.mxu0 0.0
    %666 = vmatpush2.msra.mxu0 0.0
    %667 = vmatprep.subr.mxu0 0.0
    %668 = vmatpush2.msra.mxu0 0.0
    %669 = vmatprep.subr.mxu0 0.0
    %670 = vmatpush2.msra.mxu0 0.0
    %671 = vmatprep.mubr.f32.mxu0 0.0
    %672 = vmatmul.mubr.f32.gmra.mxu0 %v605
    %v673 = vpop.f32.mrf.mxu0
    %v674 = vadd.f32 0.0, %v673
    %v675 = vpop.f32.mrf.mxu0
    %676 = vdwg.mxu0
    %v678 = vsel %vm603, %v459, 0
    %680 = vmatprep.subr.mxu0 0.0
    %681 = vmatpush1.msra.mxu0 0.0
    %682 = vmatprep.subr.mxu0 0.0
    %683 = vmatpush1.msra.mxu0 0.0
    %684 = vmatprep.subr.mxu0 0.0
    %685 = vmatpush1.msra.mxu0 0.0
    %686 = vmatprep.subr.mxu0 0.0
    %687 = vmatpush1.msra.mxu0 0.0
    %688 = vmatprep.subr.mxu0 0.0
    %689 = vmatpush1.msra.mxu0 0.0
    %690 = vmatprep.subr.mxu0 0.0
    %691 = vmatpush1.msra.mxu0 0.0
    %692 = vmatprep.subr.mxu0 0.0
    %693 = vmatpush1.msra.mxu0 0.0
    %694 = vmatprep.subr.mxu0 0.0
    %695 = vmatpush1.msra.mxu0 0.0
    %696 = vmatprep.subr.mxu0 0.0
    %697 = vmatpush1.msra.mxu0 0.0
    %698 = vmatprep.subr.mxu0 0.0
    %699 = vmatpush1.msra.mxu0 0.0
    %700 = vmatprep.subr.mxu0 0.0
    %701 = vmatpush1.msra.mxu0 0.0
    %702 = vmatprep.subr.mxu0 0.0
    %703 = vmatpush1.msra.mxu0 0.0
    %704 = vmatprep.subr.mxu0 0.0
    %705 = vmatpush1.msra.mxu0 0.0
    %706 = vmatprep.subr.mxu0 0.0
    %707 = vmatpush1.msra.mxu0 0.0
    %708 = vmatprep.subr.mxu0 0.0
    %709 = vmatpush1.msra.mxu0 0.0
    %710 = vmatprep.subr.mxu0 0.0
    %711 = vmatpush1.msra.mxu0 %v556
    %712 = vmatprep.subr.mxu0 0.0
    %713 = vmatpush2.msra.mxu0 0.0
    %714 = vmatprep.subr.mxu0 0.0
    %715 = vmatpush2.msra.mxu0 0.0
    %716 = vmatprep.subr.mxu0 0.0
    %717 = vmatpush2.msra.mxu0 0.0
    %718 = vmatprep.subr.mxu0 0.0
    %719 = vmatpush2.msra.mxu0 0.0
    %720 = vmatprep.subr.mxu0 0.0
    %721 = vmatpush2.msra.mxu0 0.0
    %722 = vmatprep.subr.mxu0 0.0
    %723 = vmatpush2.msra.mxu0 0.0
    %724 = vmatprep.subr.mxu0 0.0
    %725 = vmatpush2.msra.mxu0 0.0
    %726 = vmatprep.subr.mxu0 0.0
    %727 = vmatpush2.msra.mxu0 0.0
    %728 = vmatprep.subr.mxu0 0.0
    %729 = vmatpush2.msra.mxu0 0.0
    %730 = vmatprep.subr.mxu0 0.0
    %731 = vmatpush2.msra.mxu0 0.0
    %732 = vmatprep.subr.mxu0 0.0
    %733 = vmatpush2.msra.mxu0 0.0
    %734 = vmatprep.subr.mxu0 0.0
    %735 = vmatpush2.msra.mxu0 0.0
    %736 = vmatprep.subr.mxu0 0.0
    %737 = vmatpush2.msra.mxu0 0.0
    %738 = vmatprep.subr.mxu0 0.0
    %739 = vmatpush2.msra.mxu0 0.0
    %740 = vmatprep.subr.mxu0 0.0
    %741 = vmatpush2.msra.mxu0 0.0
    %742 = vmatprep.subr.mxu0 0.0
    %743 = vmatpush2.msra.mxu0 0.0
    %744 = vmatprep.mubr.f32.mxu0 0.0
    %745 = vmatmul.mubr.f32.gmra.mxu0 %v678
    %v746 = vpop.f32.mrf.mxu0
    %v747 = vadd.f32 0.0, %v746
    %v748 = vpop.f32.mrf.mxu0
    %749 = vdwg.mxu0
    %v751 = vsel %vm603, %v491, 0
    %753 = vmatprep.subr.mxu0 0.0
    %754 = vmatpush1.msra.mxu0 0.0
    %755 = vmatprep.subr.mxu0 0.0
    %756 = vmatpush1.msra.mxu0 0.0
    %757 = vmatprep.subr.mxu0 0.0
    %758 = vmatpush1.msra.mxu0 0.0
    %759 = vmatprep.subr.mxu0 0.0
    %760 = vmatpush1.msra.mxu0 0.0
    %761 = vmatprep.subr.mxu0 0.0
    %762 = vmatpush1.msra.mxu0 0.0
    %763 = vmatprep.subr.mxu0 0.0
    %764 = vmatpush1.msra.mxu0 0.0
    %765 = vmatprep.subr.mxu0 0.0
    %766 = vmatpush1.msra.mxu0 0.0
    %767 = vmatprep.subr.mxu0 0.0
    %768 = vmatpush1.msra.mxu0 0.0
    %769 = vmatprep.subr.mxu0 0.0
    %770 = vmatpush1.msra.mxu0 0.0
    %771 = vmatprep.subr.mxu0 0.0
    %772 = vmatpush1.msra.mxu0 0.0
    %773 = vmatprep.subr.mxu0 0.0
    %774 = vmatpush1.msra.mxu0 0.0
    %775 = vmatprep.subr.mxu0 0.0
    %776 = vmatpush1.msra.mxu0 0.0
    %777 = vmatprep.subr.mxu0 0.0
    %778 = vmatpush1.msra.mxu0 0.0
    %779 = vmatprep.subr.mxu0 0.0
    %780 = vmatpush1.msra.mxu0 0.0
    %781 = vmatprep.subr.mxu0 0.0
    %782 = vmatpush1.msra.mxu0 0.0
    %783 = vmatprep.subr.mxu0 0.0
    %784 = vmatpush1.msra.mxu0 %v557
    %785 = vmatprep.subr.mxu0 0.0
    %786 = vmatpush2.msra.mxu0 0.0
    %787 = vmatprep.subr.mxu0 0.0
    %788 = vmatpush2.msra.mxu0 0.0
    %789 = vmatprep.subr.mxu0 0.0
    %790 = vmatpush2.msra.mxu0 0.0
    %791 = vmatprep.subr.mxu0 0.0
    %792 = vmatpush2.msra.mxu0 0.0
    %793 = vmatprep.subr.mxu0 0.0
    %794 = vmatpush2.msra.mxu0 0.0
    %795 = vmatprep.subr.mxu0 0.0
    %796 = vmatpush2.msra.mxu0 0.0
    %797 = vmatprep.subr.mxu0 0.0
    %798 = vmatpush2.msra.mxu0 0.0
    %799 = vmatprep.subr.mxu0 0.0
    %800 = vmatpush2.msra.mxu0 0.0
    %801 = vmatprep.subr.mxu0 0.0
    %802 = vmatpush2.msra.mxu0 0.0
    %803 = vmatprep.subr.mxu0 0.0
    %804 = vmatpush2.msra.mxu0 0.0
    %805 = vmatprep.subr.mxu0 0.0
    %806 = vmatpush2.msra.mxu0 0.0
    %807 = vmatprep.subr.mxu0 0.0
    %808 = vmatpush2.msra.mxu0 0.0
    %809 = vmatprep.subr.mxu0 0.0
    %810 = vmatpush2.msra.mxu0 0.0
    %811 = vmatprep.subr.mxu0 0.0
    %812 = vmatpush2.msra.mxu0 0.0
    %813 = vmatprep.subr.mxu0 0.0
    %814 = vmatpush2.msra.mxu0 0.0
    %815 = vmatprep.subr.mxu0 0.0
    %816 = vmatpush2.msra.mxu0 0.0
    %817 = vmatprep.mubr.f32.mxu0 0.0
    %818 = vmatmul.mubr.f32.gmra.mxu0 %v751
    %v819 = vpop.f32.mrf.mxu0
    %v820 = vadd.f32 0.0, %v819
    %v821 = vpop.f32.mrf.mxu0
    %822 = vdwg.mxu0
    %v824 = vsel %vm603, %v523, 0
    %826 = vmatprep.subr.mxu0 0.0
    %827 = vmatpush1.msra.mxu0 0.0
    %828 = vmatprep.subr.mxu0 0.0
    %829 = vmatpush1.msra.mxu0 0.0
    %830 = vmatprep.subr.mxu0 0.0
    %831 = vmatpush1.msra.mxu0 0.0
    %832 = vmatprep.subr.mxu0 0.0
    %833 = vmatpush1.msra.mxu0 0.0
    %834 = vmatprep.subr.mxu0 0.0
    %835 = vmatpush1.msra.mxu0 0.0
    %836 = vmatprep.subr.mxu0 0.0
    %837 = vmatpush1.msra.mxu0 0.0
    %838 = vmatprep.subr.mxu0 0.0
    %839 = vmatpush1.msra.mxu0 0.0
    %840 = vmatprep.subr.mxu0 0.0
    %841 = vmatpush1.msra.mxu0 0.0
    %842 = vmatprep.subr.mxu0 0.0
    %843 = vmatpush1.msra.mxu0 0.0
    %844 = vmatprep.subr.mxu0 0.0
    %845 = vmatpush1.msra.mxu0 0.0
    %846 = vmatprep.subr.mxu0 0.0
    %847 = vmatpush1.msra.mxu0 0.0
    %848 = vmatprep.subr.mxu0 0.0
    %849 = vmatpush1.msra.mxu0 0.0
    %850 = vmatprep.subr.mxu0 0.0
    %851 = vmatpush1.msra.mxu0 0.0
    %852 = vmatprep.subr.mxu0 0.0
    %853 = vmatpush1.msra.mxu0 0.0
    %854 = vmatprep.subr.mxu0 0.0
    %855 = vmatpush1.msra.mxu0 0.0
    %856 = vmatprep.subr.mxu0 0.0
    %857 = vmatpush1.msra.mxu0 %v558
    %858 = vmatprep.subr.mxu0 0.0
    %859 = vmatpush2.msra.mxu0 0.0
    %860 = vmatprep.subr.mxu0 0.0
    %861 = vmatpush2.msra.mxu0 0.0
    %862 = vmatprep.subr.mxu0 0.0
    %863 = vmatpush2.msra.mxu0 0.0
    %864 = vmatprep.subr.mxu0 0.0
    %865 = vmatpush2.msra.mxu0 0.0
    %866 = vmatprep.subr.mxu0 0.0
    %867 = vmatpush2.msra.mxu0 0.0
    %868 = vmatprep.subr.mxu0 0.0
    %869 = vmatpush2.msra.mxu0 0.0
    %870 = vmatprep.subr.mxu0 0.0
    %871 = vmatpush2.msra.mxu0 0.0
    %872 = vmatprep.subr.mxu0 0.0
    %873 = vmatpush2.msra.mxu0 0.0
    %874 = vmatprep.subr.mxu0 0.0
    %875 = vmatpush2.msra.mxu0 0.0
    %876 = vmatprep.subr.mxu0 0.0
    %877 = vmatpush2.msra.mxu0 0.0
    %878 = vmatprep.subr.mxu0 0.0
    %879 = vmatpush2.msra.mxu0 0.0
    %880 = vmatprep.subr.mxu0 0.0
    %881 = vmatpush2.msra.mxu0 0.0
    %882 = vmatprep.subr.mxu0 0.0
    %883 = vmatpush2.msra.mxu0 0.0
    %884 = vmatprep.subr.mxu0 0.0
    %885 = vmatpush2.msra.mxu0 0.0
    %886 = vmatprep.subr.mxu0 0.0
    %887 = vmatpush2.msra.mxu0 0.0
    %888 = vmatprep.subr.mxu0 0.0
    %889 = vmatpush2.msra.mxu0 0.0
    %890 = vmatprep.mubr.f32.mxu0 0.0
    %891 = vmatmul.mubr.f32.gmra.mxu0 %v824
    %v892 = vpop.f32.mrf.mxu0
    %v893 = vadd.f32 0.0, %v892
    %v894 = vpop.f32.mrf.mxu0
    %895 = vdwg.mxu0
    %v896 = vmul.f32 %v674, 0.35355338
    %v897 = vmul.f32 %v747, 0.35355338
    %v898 = vmul.f32 %v820, 0.35355338
    %v899 = vmul.f32 %v893, 0.35355338
    %v900 = vld [vmem:[#allocation5] sm:$0xff]
    %vm901 = vcmp.gt.s32.totalorder %v900, 0
    %v902 = vsel %vm901, 1, 0
    %vm903 = vcmp.eq.s32.totalorder %v902, 1
    %v904 = vsel %vm903, -1e+09, %v896
    %v905 = vsel %vm903, -1e+09, %v897
    %v906 = vsel %vm903, -1e+09, %v898
    %v907 = vsel %vm903, -1e+09, %v899
    %v908 = vsel %vm603, %v904, -inf
    %909 = vmax.xlane.f32.xlu0 %v908
    %v910 = vpop.xlane.xlu0 %909
    %v911 = vsel %vm603, %v905, -inf
    %912 = vmax.xlane.f32.xlu0 %v911
    %v913 = vpop.xlane.xlu0 %912
    %v914 = vsel %vm603, %v906, -inf
    %915 = vmax.xlane.f32.xlu0 %v914
    %v916 = vpop.xlane.xlu0 %915
    %v917 = vsel %vm603, %v907, -inf
    %918 = vmax.xlane.f32.xlu0 %v917
    %v919 = vpop.xlane.xlu0 %918
    %v920 = vsub.f32 %v904, %v910
    %v921 = vsub.f32 %v905, %v913
    %v922 = vsub.f32 %v906, %v916
    %v923 = vsub.f32 %v907, %v919
    %v924 = vmul.f32 %v920, 1.442695
    %v925 = vpow.pop %v924
    %v926 = vmul.f32 %v921, 1.442695
    %v927 = vpow.pop %v926
    %v928 = vmul.f32 %v922, 1.442695
    %v929 = vpow.pop %v928
    %v930 = vmul.f32 %v923, 1.442695
    %v931 = vpow.pop %v930
    %v932 = vsel %vm603, %v925, 0.0
    %933 = vadd.xlane.f32.xlu0 %v932
    %v934 = vpop.xlane.xlu0 %933
    %v935 = vsel %vm603, %v927, 0.0
    %936 = vadd.xlane.f32.xlu0 %v935
    %v937 = vpop.xlane.xlu0 %936
    %v938 = vsel %vm603, %v929, 0.0
    %939 = vadd.xlane.f32.xlu0 %v938
    %v940 = vpop.xlane.xlu0 %939
    %v941 = vsel %vm603, %v931, 0.0
    %942 = vadd.xlane.f32.xlu0 %v941
    %v943 = vpop.xlane.xlu0 %942
    %v944 = vrcp.pop %v934
    %v945 = vmul.f32 %v925, %v944
    %v946 = vrcp.pop %v937
    %v947 = vmul.f32 %v927, %v946
    %v948 = vrcp.pop %v940
    %v949 = vmul.f32 %v929, %v948
    %v950 = vrcp.pop %v943
    %v951 = vmul.f32 %v931, %v950
    %952 = vst.msk [vmem:[#allocation11] sm:$0xff] %vm603, %v945
    %953 = vst.msk [vmem:[#allocation11 + $0x8] sm:$0xff] %vm603, %v947
    %954 = vst.msk [vmem:[#allocation11 + $0x10] sm:$0xff] %vm603, %v949
    %955 = vst.msk [vmem:[#allocation11 + $0x18] sm:$0xff] %vm603, %v951
    %v957 = vsel %vm603, %v945, 0
    %v960 = vsel %vm603, %v587, 0
    %962 = vmatprep.subr.mxu0 0.0
    %963 = vmatpush1.xpose.msra.mxu0 0.0
    %964 = vmatprep.subr.mxu0 0.0
    %965 = vmatpush1.xpose.msra.mxu0 0.0
    %966 = vmatprep.subr.mxu0 0.0
    %967 = vmatpush1.xpose.msra.mxu0 0.0
    %968 = vmatprep.subr.mxu0 0.0
    %969 = vmatpush1.xpose.msra.mxu0 0.0
    %970 = vmatprep.subr.mxu0 0.0
    %971 = vmatpush1.xpose.msra.mxu0 0.0
    %972 = vmatprep.subr.mxu0 0.0
    %973 = vmatpush1.xpose.msra.mxu0 0.0
    %974 = vmatprep.subr.mxu0 0.0
    %975 = vmatpush1.xpose.msra.mxu0 0.0
    %976 = vmatprep.subr.mxu0 0.0
    %977 = vmatpush1.xpose.msra.mxu0 0.0
    %978 = vmatprep.subr.mxu0 0.0
    %979 = vmatpush1.xpose.msra.mxu0 0.0
    %980 = vmatprep.subr.mxu0 0.0
    %981 = vmatpush1.xpose.msra.mxu0 0.0
    %982 = vmatprep.subr.mxu0 0.0
    %983 = vmatpush1.xpose.msra.mxu0 0.0
    %984 = vmatprep.subr.mxu0 0.0
    %985 = vmatpush1.xpose.msra.mxu0 0.0
    %986 = vmatprep.subr.mxu0 0.0
    %987 = vmatpush1.xpose.msra.mxu0 0.0
    %988 = vmatprep.subr.mxu0 0.0
    %989 = vmatpush1.xpose.msra.mxu0 0.0
    %990 = vmatprep.subr.mxu0 0.0
    %991 = vmatpush1.xpose.msra.mxu0 0.0
    %992 = vmatprep.subr.mxu0 0.0
    %993 = vmatpush1.xpose.msra.mxu0 %v960
    %994 = vmatprep.subr.mxu0 0.0
    %995 = vmatpush2.xpose.msra.mxu0 0.0
    %996 = vmatprep.subr.mxu0 0.0
    %997 = vmatpush2.xpose.msra.mxu0 0.0
    %998 = vmatprep.subr.mxu0 0.0
    %999 = vmatpush2.xpose.msra.mxu0 0.0
    %1000 = vmatprep.subr.mxu0 0.0
    %1001 = vmatpush2.xpose.msra.mxu0 0.0
    %1002 = vmatprep.subr.mxu0 0.0
    %1003 = vmatpush2.xpose.msra.mxu0 0.0
    %1004 = vmatprep.subr.mxu0 0.0
    %1005 = vmatpush2.xpose.msra.mxu0 0.0
    %1006 = vmatprep.subr.mxu0 0.0
    %1007 = vmatpush2.xpose.msra.mxu0 0.0
    %1008 = vmatprep.subr.mxu0 0.0
    %1009 = vmatpush2.xpose.msra.mxu0 0.0
    %1010 = vmatprep.subr.mxu0 0.0
    %1011 = vmatpush2.xpose.msra.mxu0 0.0
    %1012 = vmatprep.subr.mxu0 0.0
    %1013 = vmatpush2.xpose.msra.mxu0 0.0
    %1014 = vmatprep.subr.mxu0 0.0
    %1015 = vmatpush2.xpose.msra.mxu0 0.0
    %1016 = vmatprep.subr.mxu0 0.0
    %1017 = vmatpush2.xpose.msra.mxu0 0.0
    %1018 = vmatprep.subr.mxu0 0.0
    %1019 = vmatpush2.xpose.msra.mxu0 0.0
    %1020 = vmatprep.subr.mxu0 0.0
    %1021 = vmatpush2.xpose.msra.mxu0 0.0
    %1022 = vmatprep.subr.mxu0 0.0
    %1023 = vmatpush2.xpose.msra.mxu0 0.0
    %1024 = vmatprep.subr.mxu0 0.0
    %1025 = vmatpush2.xpose.msra.mxu0 0.0
    %1026 = vmatprep.mubr.f32.mxu0 0.0
    %1027 = vmatmul.mubr.f32.gmra.mxu0 %v957
    %v1028 = vpop.f32.mrf.mxu0
    %v1029 = vadd.f32 0.0, %v1028
    %v1030 = vpop.f32.mrf.mxu0
    %1031 = vdwg.mxu0
    %v1033 = vsel %vm603, %v947, 0
    %v1036 = vsel %vm603, %v588, 0
    %1038 = vmatprep.subr.mxu0 0.0
    %1039 = vmatpush1.xpose.msra.mxu0 0.0
    %1040 = vmatprep.subr.mxu0 0.0
    %1041 = vmatpush1.xpose.msra.mxu0 0.0
    %1042 = vmatprep.subr.mxu0 0.0
    %1043 = vmatpush1.xpose.msra.mxu0 0.0
    %1044 = vmatprep.subr.mxu0 0.0
    %1045 = vmatpush1.xpose.msra.mxu0 0.0
    %1046 = vmatprep.subr.mxu0 0.0
    %1047 = vmatpush1.xpose.msra.mxu0 0.0
    %1048 = vmatprep.subr.mxu0 0.0
    %1049 = vmatpush1.xpose.msra.mxu0 0.0
    %1050 = vmatprep.subr.mxu0 0.0
    %1051 = vmatpush1.xpose.msra.mxu0 0.0
    %1052 = vmatprep.subr.mxu0 0.0
    %1053 = vmatpush1.xpose.msra.mxu0 0.0
    %1054 = vmatprep.subr.mxu0 0.0
    %1055 = vmatpush1.xpose.msra.mxu0 0.0
    %1056 = vmatprep.subr.mxu0 0.0
    %1057 = vmatpush1.xpose.msra.mxu0 0.0
    %1058 = vmatprep.subr.mxu0 0.0
    %1059 = vmatpush1.xpose.msra.mxu0 0.0
    %1060 = vmatprep.subr.mxu0 0.0
    %1061 = vmatpush1.xpose.msra.mxu0 0.0
    %1062 = vmatprep.subr.mxu0 0.0
    %1063 = vmatpush1.xpose.msra.mxu0 0.0
    %1064 = vmatprep.subr.mxu0 0.0
    %1065 = vmatpush1.xpose.msra.mxu0 0.0
    %1066 = vmatprep.subr.mxu0 0.0
    %1067 = vmatpush1.xpose.msra.mxu0 0.0
    %1068 = vmatprep.subr.mxu0 0.0
    %1069 = vmatpush1.xpose.msra.mxu0 %v1036
    %1070 = vmatprep.subr.mxu0 0.0
    %1071 = vmatpush2.xpose.msra.mxu0 0.0
    %1072 = vmatprep.subr.mxu0 0.0
    %1073 = vmatpush2.xpose.msra.mxu0 0.0
    %1074 = vmatprep.subr.mxu0 0.0
    %1075 = vmatpush2.xpose.msra.mxu0 0.0
    %1076 = vmatprep.subr.mxu0 0.0
    %1077 = vmatpush2.xpose.msra.mxu0 0.0
    %1078 = vmatprep.subr.mxu0 0.0
    %1079 = vmatpush2.xpose.msra.mxu0 0.0
    %1080 = vmatprep.subr.mxu0 0.0
    %1081 = vmatpush2.xpose.msra.mxu0 0.0
    %1082 = vmatprep.subr.mxu0 0.0
    %1083 = vmatpush2.xpose.msra.mxu0 0.0
    %1084 = vmatprep.subr.mxu0 0.0
    %1085 = vmatpush2.xpose.msra.mxu0 0.0
    %1086 = vmatprep.subr.mxu0 0.0
    %1087 = vmatpush2.xpose.msra.mxu0 0.0
    %1088 = vmatprep.subr.mxu0 0.0
    %1089 = vmatpush2.xpose.msra.mxu0 0.0
    %1090 = vmatprep.subr.mxu0 0.0
    %1091 = vmatpush2.xpose.msra.mxu0 0.0
    %1092 = vmatprep.subr.mxu0 0.0
    %1093 = vmatpush2.xpose.msra.mxu0 0.0
    %1094 = vmatprep.subr.mxu0 0.0
    %1095 = vmatpush2.xpose.msra.mxu0 0.0
    %1096 = vmatprep.subr.mxu0 0.0
    %1097 = vmatpush2.xpose.msra.mxu0 0.0
    %1098 = vmatprep.subr.mxu0 0.0
    %1099 = vmatpush2.xpose.msra.mxu0 0.0
    %1100 = vmatprep.subr.mxu0 0.0
    %1101 = vmatpush2.xpose.msra.mxu0 0.0
    %1102 = vmatprep.mubr.f32.mxu0 0.0
    %1103 = vmatmul.mubr.f32.gmra.mxu0 %v1033
    %v1104 = vpop.f32.mrf.mxu0
    %v1105 = vadd.f32 0.0, %v1104
    %v1106 = vpop.f32.mrf.mxu0
    %1107 = vdwg.mxu0
    %v1109 = vsel %vm603, %v949, 0
    %v1112 = vsel %vm603, %v589, 0
    %1114 = vmatprep.subr.mxu0 0.0
    %1115 = vmatpush1.xpose.msra.mxu0 0.0
    %1116 = vmatprep.subr.mxu0 0.0
    %1117 = vmatpush1.xpose.msra.mxu0 0.0
    %1118 = vmatprep.subr.mxu0 0.0
    %1119 = vmatpush1.xpose.msra.mxu0 0.0
    %1120 = vmatprep.subr.mxu0 0.0
    %1121 = vmatpush1.xpose.msra.mxu0 0.0
    %1122 = vmatprep.subr.mxu0 0.0
    %1123 = vmatpush1.xpose.msra.mxu0 0.0
    %1124 = vmatprep.subr.mxu0 0.0
    %1125 = vmatpush1.xpose.msra.mxu0 0.0
    %1126 = vmatprep.subr.mxu0 0.0
    %1127 = vmatpush1.xpose.msra.mxu0 0.0
    %1128 = vmatprep.subr.mxu0 0.0
    %1129 = vmatpush1.xpose.msra.mxu0 0.0
    %1130 = vmatprep.subr.mxu0 0.0
    %1131 = vmatpush1.xpose.msra.mxu0 0.0
    %1132 = vmatprep.subr.mxu0 0.0
    %1133 = vmatpush1.xpose.msra.mxu0 0.0
    %1134 = vmatprep.subr.mxu0 0.0
    %1135 = vmatpush1.xpose.msra.mxu0 0.0
    %1136 = vmatprep.subr.mxu0 0.0
    %1137 = vmatpush1.xpose.msra.mxu0 0.0
    %1138 = vmatprep.subr.mxu0 0.0
    %1139 = vmatpush1.xpose.msra.mxu0 0.0
    %1140 = vmatprep.subr.mxu0 0.0
    %1141 = vmatpush1.xpose.msra.mxu0 0.0
    %1142 = vmatprep.subr.mxu0 0.0
    %1143 = vmatpush1.xpose.msra.mxu0 0.0
    %1144 = vmatprep.subr.mxu0 0.0
    %1145 = vmatpush1.xpose.msra.mxu0 %v1112
    %1146 = vmatprep.subr.mxu0 0.0
    %1147 = vmatpush2.xpose.msra.mxu0 0.0
    %1148 = vmatprep.subr.mxu0 0.0
    %1149 = vmatpush2.xpose.msra.mxu0 0.0
    %1150 = vmatprep.subr.mxu0 0.0
    %1151 = vmatpush2.xpose.msra.mxu0 0.0
    %1152 = vmatprep.subr.mxu0 0.0
    %1153 = vmatpush2.xpose.msra.mxu0 0.0
    %1154 = vmatprep.subr.mxu0 0.0
    %1155 = vmatpush2.xpose.msra.mxu0 0.0
    %1156 = vmatprep.subr.mxu0 0.0
    %1157 = vmatpush2.xpose.msra.mxu0 0.0
    %1158 = vmatprep.subr.mxu0 0.0
    %1159 = vmatpush2.xpose.msra.mxu0 0.0
    %1160 = vmatprep.subr.mxu0 0.0
    %1161 = vmatpush2.xpose.msra.mxu0 0.0
    %1162 = vmatprep.subr.mxu0 0.0
    %1163 = vmatpush2.xpose.msra.mxu0 0.0
    %1164 = vmatprep.subr.mxu0 0.0
    %1165 = vmatpush2.xpose.msra.mxu0 0.0
    %1166 = vmatprep.subr.mxu0 0.0
    %1167 = vmatpush2.xpose.msra.mxu0 0.0
    %1168 = vmatprep.subr.mxu0 0.0
    %1169 = vmatpush2.xpose.msra.mxu0 0.0
    %1170 = vmatprep.subr.mxu0 0.0
    %1171 = vmatpush2.xpose.msra.mxu0 0.0
    %1172 = vmatprep.subr.mxu0 0.0
    %1173 = vmatpush2.xpose.msra.mxu0 0.0
    %1174 = vmatprep.subr.mxu0 0.0
    %1175 = vmatpush2.xpose.msra.mxu0 0.0
    %1176 = vmatprep.subr.mxu0 0.0
    %1177 = vmatpush2.xpose.msra.mxu0 0.0
    %1178 = vmatprep.mubr.f32.mxu0 0.0
    %1179 = vmatmul.mubr.f32.gmra.mxu0 %v1109
    %v1180 = vpop.f32.mrf.mxu0
    %v1181 = vadd.f32 0.0, %v1180
    %v1182 = vpop.f32.mrf.mxu0
    %1183 = vdwg.mxu0
    %v1185 = vsel %vm603, %v951, 0
    %v1188 = vsel %vm603, %v590, 0
    %1190 = vmatprep.subr.mxu0 0.0
    %1191 = vmatpush1.xpose.msra.mxu0 0.0
    %1192 = vmatprep.subr.mxu0 0.0
    %1193 = vmatpush1.xpose.msra.mxu0 0.0
    %1194 = vmatprep.subr.mxu0 0.0
    %1195 = vmatpush1.xpose.msra.mxu0 0.0
    %1196 = vmatprep.subr.mxu0 0.0
    %1197 = vmatpush1.xpose.msra.mxu0 0.0
    %1198 = vmatprep.subr.mxu0 0.0
    %1199 = vmatpush1.xpose.msra.mxu0 0.0
    %1200 = vmatprep.subr.mxu0 0.0
    %1201 = vmatpush1.xpose.msra.mxu0 0.0
    %1202 = vmatprep.subr.mxu0 0.0
    %1203 = vmatpush1.xpose.msra.mxu0 0.0
    %1204 = vmatprep.subr.mxu0 0.0
    %1205 = vmatpush1.xpose.msra.mxu0 0.0
    %1206 = vmatprep.subr.mxu0 0.0
    %1207 = vmatpush1.xpose.msra.mxu0 0.0
    %1208 = vmatprep.subr.mxu0 0.0
    %1209 = vmatpush1.xpose.msra.mxu0 0.0
    %1210 = vmatprep.subr.mxu0 0.0
    %1211 = vmatpush1.xpose.msra.mxu0 0.0
    %1212 = vmatprep.subr.mxu0 0.0
    %1213 = vmatpush1.xpose.msra.mxu0 0.0
    %1214 = vmatprep.subr.mxu0 0.0
    %1215 = vmatpush1.xpose.msra.mxu0 0.0
    %1216 = vmatprep.subr.mxu0 0.0
    %1217 = vmatpush1.xpose.msra.mxu0 0.0
    %1218 = vmatprep.subr.mxu0 0.0
    %1219 = vmatpush1.xpose.msra.mxu0 0.0
    %1220 = vmatprep.subr.mxu0 0.0
    %1221 = vmatpush1.xpose.msra.mxu0 %v1188
    %1222 = vmatprep.subr.mxu0 0.0
    %1223 = vmatpush2.xpose.msra.mxu0 0.0
    %1224 = vmatprep.subr.mxu0 0.0
    %1225 = vmatpush2.xpose.msra.mxu0 0.0
    %1226 = vmatprep.subr.mxu0 0.0
    %1227 = vmatpush2.xpose.msra.mxu0 0.0
    %1228 = vmatprep.subr.mxu0 0.0
    %1229 = vmatpush2.xpose.msra.mxu0 0.0
    %1230 = vmatprep.subr.mxu0 0.0
    %1231 = vmatpush2.xpose.msra.mxu0 0.0
    %1232 = vmatprep.subr.mxu0 0.0
    %1233 = vmatpush2.xpose.msra.mxu0 0.0
    %1234 = vmatprep.subr.mxu0 0.0
    %1235 = vmatpush2.xpose.msra.mxu0 0.0
    %1236 = vmatprep.subr.mxu0 0.0
    %1237 = vmatpush2.xpose.msra.mxu0 0.0
    %1238 = vmatprep.subr.mxu0 0.0
    %1239 = vmatpush2.xpose.msra.mxu0 0.0
    %1240 = vmatprep.subr.mxu0 0.0
    %1241 = vmatpush2.xpose.msra.mxu0 0.0
    %1242 = vmatprep.subr.mxu0 0.0
    %1243 = vmatpush2.xpose.msra.mxu0 0.0
    %1244 = vmatprep.subr.mxu0 0.0
    %1245 = vmatpush2.xpose.msra.mxu0 0.0
    %1246 = vmatprep.subr.mxu0 0.0
    %1247 = vmatpush2.xpose.msra.mxu0 0.0
    %1248 = vmatprep.subr.mxu0 0.0
    %1249 = vmatpush2.xpose.msra.mxu0 0.0
    %1250 = vmatprep.subr.mxu0 0.0
    %1251 = vmatpush2.xpose.msra.mxu0 0.0
    %1252 = vmatprep.subr.mxu0 0.0
    %1253 = vmatpush2.xpose.msra.mxu0 0.0
    %1254 = vmatprep.mubr.f32.mxu0 0.0
    %1255 = vmatmul.mubr.f32.gmra.mxu0 %v1185
    %v1256 = vpop.f32.mrf.mxu0
    %v1257 = vadd.f32 0.0, %v1256
    %v1258 = vpop.f32.mrf.mxu0
    %1259 = vdwg.mxu0
    %1261 = vrot.lane.b32.xlu0 %v555, 120
    %v1262 = vpop.permute.xlu0 %1261
    %v1265 = vsel %vm603, %v428, 0
    %1267 = vmatprep.subr.mxu0 0.0
    %1268 = vmatpush1.msra.mxu0 0.0
    %1269 = vmatprep.subr.mxu0 0.0
    %1270 = vmatpush1.msra.mxu0 0.0
    %1271 = vmatprep.subr.mxu0 0.0
    %1272 = vmatpush1.msra.mxu0 0.0
    %1273 = vmatprep.subr.mxu0 0.0
    %1274 = vmatpush1.msra.mxu0 0.0
    %1275 = vmatprep.subr.mxu0 0.0
    %1276 = vmatpush1.msra.mxu0 0.0
    %1277 = vmatprep.subr.mxu0 0.0
    %1278 = vmatpush1.msra.mxu0 0.0
    %1279 = vmatprep.subr.mxu0 0.0
    %1280 = vmatpush1.msra.mxu0 0.0
    %1281 = vmatprep.subr.mxu0 0.0
    %1282 = vmatpush1.msra.mxu0 0.0
    %1283 = vmatprep.subr.mxu0 0.0
    %1284 = vmatpush1.msra.mxu0 0.0
    %1285 = vmatprep.subr.mxu0 0.0
    %1286 = vmatpush1.msra.mxu0 0.0
    %1287 = vmatprep.subr.mxu0 0.0
    %1288 = vmatpush1.msra.mxu0 0.0
    %1289 = vmatprep.subr.mxu0 0.0
    %1290 = vmatpush1.msra.mxu0 0.0
    %1291 = vmatprep.subr.mxu0 0.0
    %1292 = vmatpush1.msra.mxu0 0.0
    %1293 = vmatprep.subr.mxu0 0.0
    %1294 = vmatpush1.msra.mxu0 0.0
    %1295 = vmatprep.subr.mxu0 0.0
    %1296 = vmatpush1.msra.mxu0 0.0
    %1297 = vmatprep.subr.mxu0 0.0
    %1298 = vmatpush1.msra.mxu0 %v1262
    %1299 = vmatprep.subr.mxu0 0.0
    %1300 = vmatpush2.msra.mxu0 0.0
    %1301 = vmatprep.subr.mxu0 0.0
    %1302 = vmatpush2.msra.mxu0 0.0
    %1303 = vmatprep.subr.mxu0 0.0
    %1304 = vmatpush2.msra.mxu0 0.0
    %1305 = vmatprep.subr.mxu0 0.0
    %1306 = vmatpush2.msra.mxu0 0.0
    %1307 = vmatprep.subr.mxu0 0.0
    %1308 = vmatpush2.msra.mxu0 0.0
    %1309 = vmatprep.subr.mxu0 0.0
    %1310 = vmatpush2.msra.mxu0 0.0
    %1311 = vmatprep.subr.mxu0 0.0
    %1312 = vmatpush2.msra.mxu0 0.0
    %1313 = vmatprep.subr.mxu0 0.0
    %1314 = vmatpush2.msra.mxu0 0.0
    %1315 = vmatprep.subr.mxu0 0.0
    %1316 = vmatpush2.msra.mxu0 0.0
    %1317 = vmatprep.subr.mxu0 0.0
    %1318 = vmatpush2.msra.mxu0 0.0
    %1319 = vmatprep.subr.mxu0 0.0
    %1320 = vmatpush2.msra.mxu0 0.0
    %1321 = vmatprep.subr.mxu0 0.0
    %1322 = vmatpush2.msra.mxu0 0.0
    %1323 = vmatprep.subr.mxu0 0.0
    %1324 = vmatpush2.msra.mxu0 0.0
    %1325 = vmatprep.subr.mxu0 0.0
    %1326 = vmatpush2.msra.mxu0 0.0
    %1327 = vmatprep.subr.mxu0 0.0
    %1328 = vmatpush2.msra.mxu0 0.0
    %1329 = vmatprep.subr.mxu0 0.0
    %1330 = vmatpush2.msra.mxu0 0.0
    %1331 = vmatprep.mubr.f32.mxu0 0.0
    %1332 = vmatmul.mubr.f32.gmra.mxu0 %v1265
    %v1333 = vpop.f32.mrf.mxu0
    %v1334 = vadd.f32 0.0, %v1333
    %v1335 = vpop.f32.mrf.mxu0
    %1336 = vdwg.mxu0
    %1338 = vrot.lane.b32.xlu0 %v556, 120
    %v1339 = vpop.permute.xlu0 %1338
    %v1342 = vsel %vm603, %v460, 0
    %1344 = vmatprep.subr.mxu0 0.0
    %1345 = vmatpush1.msra.mxu0 0.0
    %1346 = vmatprep.subr.mxu0 0.0
    %1347 = vmatpush1.msra.mxu0 0.0
    %1348 = vmatprep.subr.mxu0 0.0
    %1349 = vmatpush1.msra.mxu0 0.0
    %1350 = vmatprep.subr.mxu0 0.0
    %1351 = vmatpush1.msra.mxu0 0.0
    %1352 = vmatprep.subr.mxu0 0.0
    %1353 = vmatpush1.msra.mxu0 0.0
    %1354 = vmatprep.subr.mxu0 0.0
    %1355 = vmatpush1.msra.mxu0 0.0
    %1356 = vmatprep.subr.mxu0 0.0
    %1357 = vmatpush1.msra.mxu0 0.0
    %1358 = vmatprep.subr.mxu0 0.0
    %1359 = vmatpush1.msra.mxu0 0.0
    %1360 = vmatprep.subr.mxu0 0.0
    %1361 = vmatpush1.msra.mxu0 0.0
    %1362 = vmatprep.subr.mxu0 0.0
    %1363 = vmatpush1.msra.mxu0 0.0
    %1364 = vmatprep.subr.mxu0 0.0
    %1365 = vmatpush1.msra.mxu0 0.0
    %1366 = vmatprep.subr.mxu0 0.0
    %1367 = vmatpush1.msra.mxu0 0.0
    %1368 = vmatprep.subr.mxu0 0.0
    %1369 = vmatpush1.msra.mxu0 0.0
    %1370 = vmatprep.subr.mxu0 0.0
    %1371 = vmatpush1.msra.mxu0 0.0
    %1372 = vmatprep.subr.mxu0 0.0
    %1373 = vmatpush1.msra.mxu0 0.0
    %1374 = vmatprep.subr.mxu0 0.0
    %1375 = vmatpush1.msra.mxu0 %v1339
    %1376 = vmatprep.subr.mxu0 0.0
    %1377 = vmatpush2.msra.mxu0 0.0
    %1378 = vmatprep.subr.mxu0 0.0
    %1379 = vmatpush2.msra.mxu0 0.0
    %1380 = vmatprep.subr.mxu0 0.0
    %1381 = vmatpush2.msra.mxu0 0.0
    %1382 = vmatprep.subr.mxu0 0.0
    %1383 = vmatpush2.msra.mxu0 0.0
    %1384 = vmatprep.subr.mxu0 0.0
    %1385 = vmatpush2.msra.mxu0 0.0
    %1386 = vmatprep.subr.mxu0 0.0
    %1387 = vmatpush2.msra.mxu0 0.0
    %1388 = vmatprep.subr.mxu0 0.0
    %1389 = vmatpush2.msra.mxu0 0.0
    %1390 = vmatprep.subr.mxu0 0.0
    %1391 = vmatpush2.msra.mxu0 0.0
    %1392 = vmatprep.subr.mxu0 0.0
    %1393 = vmatpush2.msra.mxu0 0.0
    %1394 = vmatprep.subr.mxu0 0.0
    %1395 = vmatpush2.msra.mxu0 0.0
    %1396 = vmatprep.subr.mxu0 0.0
    %1397 = vmatpush2.msra.mxu0 0.0
    %1398 = vmatprep.subr.mxu0 0.0
    %1399 = vmatpush2.msra.mxu0 0.0
    %1400 = vmatprep.subr.mxu0 0.0
    %1401 = vmatpush2.msra.mxu0 0.0
    %1402 = vmatprep.subr.mxu0 0.0
    %1403 = vmatpush2.msra.mxu0 0.0
    %1404 = vmatprep.subr.mxu0 0.0
    %1405 = vmatpush2.msra.mxu0 0.0
    %1406 = vmatprep.subr.mxu0 0.0
    %1407 = vmatpush2.msra.mxu0 0.0
    %1408 = vmatprep.mubr.f32.mxu0 0.0
    %1409 = vmatmul.mubr.f32.gmra.mxu0 %v1342
    %v1410 = vpop.f32.mrf.mxu0
    %v1411 = vadd.f32 0.0, %v1410
    %v1412 = vpop.f32.mrf.mxu0
    %1413 = vdwg.mxu0
    %1415 = vrot.lane.b32.xlu0 %v557, 120
    %v1416 = vpop.permute.xlu0 %1415
    %v1419 = vsel %vm603, %v492, 0
    %1421 = vmatprep.subr.mxu0 0.0
    %1422 = vmatpush1.msra.mxu0 0.0
    %1423 = vmatprep.subr.mxu0 0.0
    %1424 = vmatpush1.msra.mxu0 0.0
    %1425 = vmatprep.subr.mxu0 0.0
    %1426 = vmatpush1.msra.mxu0 0.0
    %1427 = vmatprep.subr.mxu0 0.0
    %1428 = vmatpush1.msra.mxu0 0.0
    %1429 = vmatprep.subr.mxu0 0.0
    %1430 = vmatpush1.msra.mxu0 0.0
    %1431 = vmatprep.subr.mxu0 0.0
    %1432 = vmatpush1.msra.mxu0 0.0
    %1433 = vmatprep.subr.mxu0 0.0
    %1434 = vmatpush1.msra.mxu0 0.0
    %1435 = vmatprep.subr.mxu0 0.0
    %1436 = vmatpush1.msra.mxu0 0.0
    %1437 = vmatprep.subr.mxu0 0.0
    %1438 = vmatpush1.msra.mxu0 0.0
    %1439 = vmatprep.subr.mxu0 0.0
    %1440 = vmatpush1.msra.mxu0 0.0
    %1441 = vmatprep.subr.mxu0 0.0
    %1442 = vmatpush1.msra.mxu0 0.0
    %1443 = vmatprep.subr.mxu0 0.0
    %1444 = vmatpush1.msra.mxu0 0.0
    %1445 = vmatprep.subr.mxu0 0.0
    %1446 = vmatpush1.msra.mxu0 0.0
    %1447 = vmatprep.subr.mxu0 0.0
    %1448 = vmatpush1.msra.mxu0 0.0
    %1449 = vmatprep.subr.mxu0 0.0
    %1450 = vmatpush1.msra.mxu0 0.0
    %1451 = vmatprep.subr.mxu0 0.0
    %1452 = vmatpush1.msra.mxu0 %v1416
    %1453 = vmatprep.subr.mxu0 0.0
    %1454 = vmatpush2.msra.mxu0 0.0
    %1455 = vmatprep.subr.mxu0 0.0
    %1456 = vmatpush2.msra.mxu0 0.0
    %1457 = vmatprep.subr.mxu0 0.0
    %1458 = vmatpush2.msra.mxu0 0.0
    %1459 = vmatprep.subr.mxu0 0.0
    %1460 = vmatpush2.msra.mxu0 0.0
    %1461 = vmatprep.subr.mxu0 0.0
    %1462 = vmatpush2.msra.mxu0 0.0
    %1463 = vmatprep.subr.mxu0 0.0
    %1464 = vmatpush2.msra.mxu0 0.0
    %1465 = vmatprep.subr.mxu0 0.0
    %1466 = vmatpush2.msra.mxu0 0.0
    %1467 = vmatprep.subr.mxu0 0.0
    %1468 = vmatpush2.msra.mxu0 0.0
    %1469 = vmatprep.subr.mxu0 0.0
    %1470 = vmatpush2.msra.mxu0 0.0
    %1471 = vmatprep.subr.mxu0 0.0
    %1472 = vmatpush2.msra.mxu0 0.0
    %1473 = vmatprep.subr.mxu0 0.0
    %1474 = vmatpush2.msra.mxu0 0.0
    %1475 = vmatprep.subr.mxu0 0.0
    %1476 = vmatpush2.msra.mxu0 0.0
    %1477 = vmatprep.subr.mxu0 0.0
    %1478 = vmatpush2.msra.mxu0 0.0
    %1479 = vmatprep.subr.mxu0 0.0
    %1480 = vmatpush2.msra.mxu0 0.0
    %1481 = vmatprep.subr.mxu0 0.0
    %1482 = vmatpush2.msra.mxu0 0.0
    %1483 = vmatprep.subr.mxu0 0.0
    %1484 = vmatpush2.msra.mxu0 0.0
    %1485 = vmatprep.mubr.f32.mxu0 0.0
    %1486 = vmatmul.mubr.f32.gmra.mxu0 %v1419
    %v1487 = vpop.f32.mrf.mxu0
    %v1488 = vadd.f32 0.0, %v1487
    %v1489 = vpop.f32.mrf.mxu0
    %1490 = vdwg.mxu0
    %1492 = vrot.lane.b32.xlu0 %v558, 120
    %v1493 = vpop.permute.xlu0 %1492
    %v1496 = vsel %vm603, %v524, 0
    %1498 = vmatprep.subr.mxu0 0.0
    %1499 = vmatpush1.msra.mxu0 0.0
    %1500 = vmatprep.subr.mxu0 0.0
    %1501 = vmatpush1.msra.mxu0 0.0
    %1502 = vmatprep.subr.mxu0 0.0
    %1503 = vmatpush1.msra.mxu0 0.0
    %1504 = vmatprep.subr.mxu0 0.0
    %1505 = vmatpush1.msra.mxu0 0.0
    %1506 = vmatprep.subr.mxu0 0.0
    %1507 = vmatpush1.msra.mxu0 0.0
    %1508 = vmatprep.subr.mxu0 0.0
    %1509 = vmatpush1.msra.mxu0 0.0
    %1510 = vmatprep.subr.mxu0 0.0
    %1511 = vmatpush1.msra.mxu0 0.0
    %1512 = vmatprep.subr.mxu0 0.0
    %1513 = vmatpush1.msra.mxu0 0.0
    %1514 = vmatprep.subr.mxu0 0.0
    %1515 = vmatpush1.msra.mxu0 0.0
    %1516 = vmatprep.subr.mxu0 0.0
    %1517 = vmatpush1.msra.mxu0 0.0
    %1518 = vmatprep.subr.mxu0 0.0
    %1519 = vmatpush1.msra.mxu0 0.0
    %1520 = vmatprep.subr.mxu0 0.0
    %1521 = vmatpush1.msra.mxu0 0.0
    %1522 = vmatprep.subr.mxu0 0.0
    %1523 = vmatpush1.msra.mxu0 0.0
    %1524 = vmatprep.subr.mxu0 0.0
    %1525 = vmatpush1.msra.mxu0 0.0
    %1526 = vmatprep.subr.mxu0 0.0
    %1527 = vmatpush1.msra.mxu0 0.0
    %1528 = vmatprep.subr.mxu0 0.0
    %1529 = vmatpush1.msra.mxu0 %v1493
    %1530 = vmatprep.subr.mxu0 0.0
    %1531 = vmatpush2.msra.mxu0 0.0
    %1532 = vmatprep.subr.mxu0 0.0
    %1533 = vmatpush2.msra.mxu0 0.0
    %1534 = vmatprep.subr.mxu0 0.0
    %1535 = vmatpush2.msra.mxu0 0.0
    %1536 = vmatprep.subr.mxu0 0.0
    %1537 = vmatpush2.msra.mxu0 0.0
    %1538 = vmatprep.subr.mxu0 0.0
    %1539 = vmatpush2.msra.mxu0 0.0
    %1540 = vmatprep.subr.mxu0 0.0
    %1541 = vmatpush2.msra.mxu0 0.0
    %1542 = vmatprep.subr.mxu0 0.0
    %1543 = vmatpush2.msra.mxu0 0.0
    %1544 = vmatprep.subr.mxu0 0.0
    %1545 = vmatpush2.msra.mxu0 0.0
    %1546 = vmatprep.subr.mxu0 0.0
    %1547 = vmatpush2.msra.mxu0 0.0
    %1548 = vmatprep.subr.mxu0 0.0
    %1549 = vmatpush2.msra.mxu0 0.0
    %1550 = vmatprep.subr.mxu0 0.0
    %1551 = vmatpush2.msra.mxu0 0.0
    %1552 = vmatprep.subr.mxu0 0.0
    %1553 = vmatpush2.msra.mxu0 0.0
    %1554 = vmatprep.subr.mxu0 0.0
    %1555 = vmatpush2.msra.mxu0 0.0
    %1556 = vmatprep.subr.mxu0 0.0
    %1557 = vmatpush2.msra.mxu0 0.0
    %1558 = vmatprep.subr.mxu0 0.0
    %1559 = vmatpush2.msra.mxu0 0.0
    %1560 = vmatprep.subr.mxu0 0.0
    %1561 = vmatpush2.msra.mxu0 0.0
    %1562 = vmatprep.mubr.f32.mxu0 0.0
    %1563 = vmatmul.mubr.f32.gmra.mxu0 %v1496
    %v1564 = vpop.f32.mrf.mxu0
    %v1565 = vadd.f32 0.0, %v1564
    %v1566 = vpop.f32.mrf.mxu0
    %1567 = vdwg.mxu0
    %v1568 = vmul.f32 %v1334, 0.35355338
    %v1569 = vmul.f32 %v1411, 0.35355338
    %v1570 = vmul.f32 %v1488, 0.35355338
    %v1571 = vmul.f32 %v1565, 0.35355338
    %s1572 = scalar_lea.vmem [#allocation5], 8
    %v1573 = vld [vmem:[%s1572] sm:$0xff]
    %vm1574 = vcmp.gt.s32.totalorder %v1573, 0
    %v1575 = vsel %vm1574, 1, 0
    %vm1576 = vcmp.eq.s32.totalorder %v1575, 1
    %v1577 = vsel %vm1576, -1e+09, %v1568
    %v1578 = vsel %vm1576, -1e+09, %v1569
    %v1579 = vsel %vm1576, -1e+09, %v1570
    %v1580 = vsel %vm1576, -1e+09, %v1571
    %v1581 = vsel %vm603, %v1577, -inf
    %1582 = vmax.xlane.f32.xlu0 %v1581
    %v1583 = vpop.xlane.xlu0 %1582
    %v1584 = vsel %vm603, %v1578, -inf
    %1585 = vmax.xlane.f32.xlu0 %v1584
    %v1586 = vpop.xlane.xlu0 %1585
    %v1587 = vsel %vm603, %v1579, -inf
    %1588 = vmax.xlane.f32.xlu0 %v1587
    %v1589 = vpop.xlane.xlu0 %1588
    %v1590 = vsel %vm603, %v1580, -inf
    %1591 = vmax.xlane.f32.xlu0 %v1590
    %v1592 = vpop.xlane.xlu0 %1591
    %v1593 = vsub.f32 %v1577, %v1583
    %v1594 = vsub.f32 %v1578, %v1586
    %v1595 = vsub.f32 %v1579, %v1589
    %v1596 = vsub.f32 %v1580, %v1592
    %v1597 = vmul.f32 %v1593, 1.442695
    %v1598 = vpow.pop %v1597
    %v1599 = vmul.f32 %v1594, 1.442695
    %v1600 = vpow.pop %v1599
    %v1601 = vmul.f32 %v1595, 1.442695
    %v1602 = vpow.pop %v1601
    %v1603 = vmul.f32 %v1596, 1.442695
    %v1604 = vpow.pop %v1603
    %v1605 = vsel %vm603, %v1598, 0.0
    %1606 = vadd.xlane.f32.xlu0 %v1605
    %v1607 = vpop.xlane.xlu0 %1606
    %v1608 = vsel %vm603, %v1600, 0.0
    %1609 = vadd.xlane.f32.xlu0 %v1608
    %v1610 = vpop.xlane.xlu0 %1609
    %v1611 = vsel %vm603, %v1602, 0.0
    %1612 = vadd.xlane.f32.xlu0 %v1611
    %v1613 = vpop.xlane.xlu0 %1612
    %v1614 = vsel %vm603, %v1604, 0.0
    %1615 = vadd.xlane.f32.xlu0 %v1614
    %v1616 = vpop.xlane.xlu0 %1615
    %v1617 = vrcp.pop %v1607
    %v1618 = vmul.f32 %v1598, %v1617
    %v1619 = vrcp.pop %v1610
    %v1620 = vmul.f32 %v1600, %v1619
    %v1621 = vrcp.pop %v1613
    %v1622 = vmul.f32 %v1602, %v1621
    %v1623 = vrcp.pop %v1616
    %v1624 = vmul.f32 %v1604, %v1623
    %s1625 = scalar_lea.vmem [#allocation11], 32
    %1626 = vst.msk [vmem:[%s1625] sm:$0xff] %vm603, %v1618
    %1627 = vst.msk [vmem:[%s1625 + $0x8] sm:$0xff] %vm603, %v1620
    %1628 = vst.msk [vmem:[%s1625 + $0x10] sm:$0xff] %vm603, %v1622
    %1629 = vst.msk [vmem:[%s1625 + $0x18] sm:$0xff] %vm603, %v1624
    %1630 = vrot.lane.b32.xlu0 %v587, 120
    %v1631 = vpop.permute.xlu0 %1630
    %v1633 = vsel %vm603, %v1618, 0
    %v1635 = vsel %vm603, %v1631, 0
    %1637 = vmatprep.subr.mxu0 0.0
    %1638 = vmatpush1.xpose.msra.mxu0 0.0
    %1639 = vmatprep.subr.mxu0 0.0
    %1640 = vmatpush1.xpose.msra.mxu0 0.0
    %1641 = vmatprep.subr.mxu0 0.0
    %1642 = vmatpush1.xpose.msra.mxu0 0.0
    %1643 = vmatprep.subr.mxu0 0.0
    %1644 = vmatpush1.xpose.msra.mxu0 0.0
    %1645 = vmatprep.subr.mxu0 0.0
    %1646 = vmatpush1.xpose.msra.mxu0 0.0
    %1647 = vmatprep.subr.mxu0 0.0
    %1648 = vmatpush1.xpose.msra.mxu0 0.0
    %1649 = vmatprep.subr.mxu0 0.0
    %1650 = vmatpush1.xpose.msra.mxu0 0.0
    %1651 = vmatprep.subr.mxu0 0.0
    %1652 = vmatpush1.xpose.msra.mxu0 0.0
    %1653 = vmatprep.subr.mxu0 0.0
    %1654 = vmatpush1.xpose.msra.mxu0 0.0
    %1655 = vmatprep.subr.mxu0 0.0
    %1656 = vmatpush1.xpose.msra.mxu0 0.0
    %1657 = vmatprep.subr.mxu0 0.0
    %1658 = vmatpush1.xpose.msra.mxu0 0.0
    %1659 = vmatprep.subr.mxu0 0.0
    %1660 = vmatpush1.xpose.msra.mxu0 0.0
    %1661 = vmatprep.subr.mxu0 0.0
    %1662 = vmatpush1.xpose.msra.mxu0 0.0
    %1663 = vmatprep.subr.mxu0 0.0
    %1664 = vmatpush1.xpose.msra.mxu0 0.0
    %1665 = vmatprep.subr.mxu0 0.0
    %1666 = vmatpush1.xpose.msra.mxu0 0.0
    %1667 = vmatprep.subr.mxu0 0.0
    %1668 = vmatpush1.xpose.msra.mxu0 %v1635
    %1669 = vmatprep.subr.mxu0 0.0
    %1670 = vmatpush2.xpose.msra.mxu0 0.0
    %1671 = vmatprep.subr.mxu0 0.0
    %1672 = vmatpush2.xpose.msra.mxu0 0.0
    %1673 = vmatprep.subr.mxu0 0.0
    %1674 = vmatpush2.xpose.msra.mxu0 0.0
    %1675 = vmatprep.subr.mxu0 0.0
    %1676 = vmatpush2.xpose.msra.mxu0 0.0
    %1677 = vmatprep.subr.mxu0 0.0
    %1678 = vmatpush2.xpose.msra.mxu0 0.0
    %1679 = vmatprep.subr.mxu0 0.0
    %1680 = vmatpush2.xpose.msra.mxu0 0.0
    %1681 = vmatprep.subr.mxu0 0.0
    %1682 = vmatpush2.xpose.msra.mxu0 0.0
    %1683 = vmatprep.subr.mxu0 0.0
    %1684 = vmatpush2.xpose.msra.mxu0 0.0
    %1685 = vmatprep.subr.mxu0 0.0
    %1686 = vmatpush2.xpose.msra.mxu0 0.0
    %1687 = vmatprep.subr.mxu0 0.0
    %1688 = vmatpush2.xpose.msra.mxu0 0.0
    %1689 = vmatprep.subr.mxu0 0.0
    %1690 = vmatpush2.xpose.msra.mxu0 0.0
    %1691 = vmatprep.subr.mxu0 0.0
    %1692 = vmatpush2.xpose.msra.mxu0 0.0
    %1693 = vmatprep.subr.mxu0 0.0
    %1694 = vmatpush2.xpose.msra.mxu0 0.0
    %1695 = vmatprep.subr.mxu0 0.0
    %1696 = vmatpush2.xpose.msra.mxu0 0.0
    %1697 = vmatprep.subr.mxu0 0.0
    %1698 = vmatpush2.xpose.msra.mxu0 0.0
    %1699 = vmatprep.subr.mxu0 0.0
    %1700 = vmatpush2.xpose.msra.mxu0 0.0
    %1701 = vmatprep.mubr.f32.mxu0 0.0
    %1702 = vmatmul.mubr.f32.gmra.mxu0 %v1633
    %v1703 = vpop.f32.mrf.mxu0
    %v1704 = vadd.f32 0.0, %v1703
    %v1705 = vpop.f32.mrf.mxu0
    %1706 = vdwg.mxu0
    %1707 = vrot.lane.b32.xlu0 %v588, 120
    %v1708 = vpop.permute.xlu0 %1707
    %v1710 = vsel %vm603, %v1620, 0
    %v1712 = vsel %vm603, %v1708, 0
    %1714 = vmatprep.subr.mxu0 0.0
    %1715 = vmatpush1.xpose.msra.mxu0 0.0
    %1716 = vmatprep.subr.mxu0 0.0
    %1717 = vmatpush1.xpose.msra.mxu0 0.0
    %1718 = vmatprep.subr.mxu0 0.0
    %1719 = vmatpush1.xpose.msra.mxu0 0.0
    %1720 = vmatprep.subr.mxu0 0.0
    %1721 = vmatpush1.xpose.msra.mxu0 0.0
    %1722 = vmatprep.subr.mxu0 0.0
    %1723 = vmatpush1.xpose.msra.mxu0 0.0
    %1724 = vmatprep.subr.mxu0 0.0
    %1725 = vmatpush1.xpose.msra.mxu0 0.0
    %1726 = vmatprep.subr.mxu0 0.0
    %1727 = vmatpush1.xpose.msra.mxu0 0.0
    %1728 = vmatprep.subr.mxu0 0.0
    %1729 = vmatpush1.xpose.msra.mxu0 0.0
    %1730 = vmatprep.subr.mxu0 0.0
    %1731 = vmatpush1.xpose.msra.mxu0 0.0
    %1732 = vmatprep.subr.mxu0 0.0
    %1733 = vmatpush1.xpose.msra.mxu0 0.0
    %1734 = vmatprep.subr.mxu0 0.0
    %1735 = vmatpush1.xpose.msra.mxu0 0.0
    %1736 = vmatprep.subr.mxu0 0.0
    %1737 = vmatpush1.xpose.msra.mxu0 0.0
    %1738 = vmatprep.subr.mxu0 0.0
    %1739 = vmatpush1.xpose.msra.mxu0 0.0
    %1740 = vmatprep.subr.mxu0 0.0
    %1741 = vmatpush1.xpose.msra.mxu0 0.0
    %1742 = vmatprep.subr.mxu0 0.0
    %1743 = vmatpush1.xpose.msra.mxu0 0.0
    %1744 = vmatprep.subr.mxu0 0.0
    %1745 = vmatpush1.xpose.msra.mxu0 %v1712
    %1746 = vmatprep.subr.mxu0 0.0
    %1747 = vmatpush2.xpose.msra.mxu0 0.0
    %1748 = vmatprep.subr.mxu0 0.0
    %1749 = vmatpush2.xpose.msra.mxu0 0.0
    %1750 = vmatprep.subr.mxu0 0.0
    %1751 = vmatpush2.xpose.msra.mxu0 0.0
    %1752 = vmatprep.subr.mxu0 0.0
    %1753 = vmatpush2.xpose.msra.mxu0 0.0
    %1754 = vmatprep.subr.mxu0 0.0
    %1755 = vmatpush2.xpose.msra.mxu0 0.0
    %1756 = vmatprep.subr.mxu0 0.0
    %1757 = vmatpush2.xpose.msra.mxu0 0.0
    %1758 = vmatprep.subr.mxu0 0.0
    %1759 = vmatpush2.xpose.msra.mxu0 0.0
    %1760 = vmatprep.subr.mxu0 0.0
    %1761 = vmatpush2.xpose.msra.mxu0 0.0
    %1762 = vmatprep.subr.mxu0 0.0
    %1763 = vmatpush2.xpose.msra.mxu0 0.0
    %1764 = vmatprep.subr.mxu0 0.0
    %1765 = vmatpush2.xpose.msra.mxu0 0.0
    %1766 = vmatprep.subr.mxu0 0.0
    %1767 = vmatpush2.xpose.msra.mxu0 0.0
    %1768 = vmatprep.subr.mxu0 0.0
    %1769 = vmatpush2.xpose.msra.mxu0 0.0
    %1770 = vmatprep.subr.mxu0 0.0
    %1771 = vmatpush2.xpose.msra.mxu0 0.0
    %1772 = vmatprep.subr.mxu0 0.0
    %1773 = vmatpush2.xpose.msra.mxu0 0.0
    %1774 = vmatprep.subr.mxu0 0.0
    %1775 = vmatpush2.xpose.msra.mxu0 0.0
    %1776 = vmatprep.subr.mxu0 0.0
    %1777 = vmatpush2.xpose.msra.mxu0 0.0
    %1778 = vmatprep.mubr.f32.mxu0 0.0
    %1779 = vmatmul.mubr.f32.gmra.mxu0 %v1710
    %v1780 = vpop.f32.mrf.mxu0
    %v1781 = vadd.f32 0.0, %v1780
    %v1782 = vpop.f32.mrf.mxu0
    %1783 = vdwg.mxu0
    %1784 = vrot.lane.b32.xlu0 %v589, 120
    %v1785 = vpop.permute.xlu0 %1784
    %v1787 = vsel %vm603, %v1622, 0
    %v1789 = vsel %vm603, %v1785, 0
    %1791 = vmatprep.subr.mxu0 0.0
    %1792 = vmatpush1.xpose.msra.mxu0 0.0
    %1793 = vmatprep.subr.mxu0 0.0
    %1794 = vmatpush1.xpose.msra.mxu0 0.0
    %1795 = vmatprep.subr.mxu0 0.0
    %1796 = vmatpush1.xpose.msra.mxu0 0.0
    %1797 = vmatprep.subr.mxu0 0.0
    %1798 = vmatpush1.xpose.msra.mxu0 0.0
    %1799 = vmatprep.subr.mxu0 0.0
    %1800 = vmatpush1.xpose.msra.mxu0 0.0
    %1801 = vmatprep.subr.mxu0 0.0
    %1802 = vmatpush1.xpose.msra.mxu0 0.0
    %1803 = vmatprep.subr.mxu0 0.0
    %1804 = vmatpush1.xpose.msra.mxu0 0.0
    %1805 = vmatprep.subr.mxu0 0.0
    %1806 = vmatpush1.xpose.msra.mxu0 0.0
    %1807 = vmatprep.subr.mxu0 0.0
    %1808 = vmatpush1.xpose.msra.mxu0 0.0
    %1809 = vmatprep.subr.mxu0 0.0
    %1810 = vmatpush1.xpose.msra.mxu0 0.0
    %1811 = vmatprep.subr.mxu0 0.0
    %1812 = vmatpush1.xpose.msra.mxu0 0.0
    %1813 = vmatprep.subr.mxu0 0.0
    %1814 = vmatpush1.xpose.msra.mxu0 0.0
    %1815 = vmatprep.subr.mxu0 0.0
    %1816 = vmatpush1.xpose.msra.mxu0 0.0
    %1817 = vmatprep.subr.mxu0 0.0
    %1818 = vmatpush1.xpose.msra.mxu0 0.0
    %1819 = vmatprep.subr.mxu0 0.0
    %1820 = vmatpush1.xpose.msra.mxu0 0.0
    %1821 = vmatprep.subr.mxu0 0.0
    %1822 = vmatpush1.xpose.msra.mxu0 %v1789
    %1823 = vmatprep.subr.mxu0 0.0
    %1824 = vmatpush2.xpose.msra.mxu0 0.0
    %1825 = vmatprep.subr.mxu0 0.0
    %1826 = vmatpush2.xpose.msra.mxu0 0.0
    %1827 = vmatprep.subr.mxu0 0.0
    %1828 = vmatpush2.xpose.msra.mxu0 0.0
    %1829 = vmatprep.subr.mxu0 0.0
    %1830 = vmatpush2.xpose.msra.mxu0 0.0
    %1831 = vmatprep.subr.mxu0 0.0
    %1832 = vmatpush2.xpose.msra.mxu0 0.0
    %1833 = vmatprep.subr.mxu0 0.0
    %1834 = vmatpush2.xpose.msra.mxu0 0.0
    %1835 = vmatprep.subr.mxu0 0.0
    %1836 = vmatpush2.xpose.msra.mxu0 0.0
    %1837 = vmatprep.subr.mxu0 0.0
    %1838 = vmatpush2.xpose.msra.mxu0 0.0
    %1839 = vmatprep.subr.mxu0 0.0
    %1840 = vmatpush2.xpose.msra.mxu0 0.0
    %1841 = vmatprep.subr.mxu0 0.0
    %1842 = vmatpush2.xpose.msra.mxu0 0.0
    %1843 = vmatprep.subr.mxu0 0.0
    %1844 = vmatpush2.xpose.msra.mxu0 0.0
    %1845 = vmatprep.subr.mxu0 0.0
    %1846 = vmatpush2.xpose.msra.mxu0 0.0
    %1847 = vmatprep.subr.mxu0 0.0
    %1848 = vmatpush2.xpose.msra.mxu0 0.0
    %1849 = vmatprep.subr.mxu0 0.0
    %1850 = vmatpush2.xpose.msra.mxu0 0.0
    %1851 = vmatprep.subr.mxu0 0.0
    %1852 = vmatpush2.xpose.msra.mxu0 0.0
    %1853 = vmatprep.subr.mxu0 0.0
    %1854 = vmatpush2.xpose.msra.mxu0 0.0
    %1855 = vmatprep.mubr.f32.mxu0 0.0
    %1856 = vmatmul.mubr.f32.gmra.mxu0 %v1787
    %v1857 = vpop.f32.mrf.mxu0
    %v1858 = vadd.f32 0.0, %v1857
    %v1859 = vpop.f32.mrf.mxu0
    %1860 = vdwg.mxu0
    %1861 = vrot.lane.b32.xlu0 %v590, 120
    %v1862 = vpop.permute.xlu0 %1861
    %v1864 = vsel %vm603, %v1624, 0
    %v1866 = vsel %vm603, %v1862, 0
    %1868 = vmatprep.subr.mxu0 0.0
    %1869 = vmatpush1.xpose.msra.mxu0 0.0
    %1870 = vmatprep.subr.mxu0 0.0
    %1871 = vmatpush1.xpose.msra.mxu0 0.0
    %1872 = vmatprep.subr.mxu0 0.0
    %1873 = vmatpush1.xpose.msra.mxu0 0.0
    %1874 = vmatprep.subr.mxu0 0.0
    %1875 = vmatpush1.xpose.msra.mxu0 0.0
    %1876 = vmatprep.subr.mxu0 0.0
    %1877 = vmatpush1.xpose.msra.mxu0 0.0
    %1878 = vmatprep.subr.mxu0 0.0
    %1879 = vmatpush1.xpose.msra.mxu0 0.0
    %1880 = vmatprep.subr.mxu0 0.0
    %1881 = vmatpush1.xpose.msra.mxu0 0.0
    %1882 = vmatprep.subr.mxu0 0.0
    %1883 = vmatpush1.xpose.msra.mxu0 0.0
    %1884 = vmatprep.subr.mxu0 0.0
    %1885 = vmatpush1.xpose.msra.mxu0 0.0
    %1886 = vmatprep.subr.mxu0 0.0
    %1887 = vmatpush1.xpose.msra.mxu0 0.0
    %1888 = vmatprep.subr.mxu0 0.0
    %1889 = vmatpush1.xpose.msra.mxu0 0.0
    %1890 = vmatprep.subr.mxu0 0.0
    %1891 = vmatpush1.xpose.msra.mxu0 0.0
    %1892 = vmatprep.subr.mxu0 0.0
    %1893 = vmatpush1.xpose.msra.mxu0 0.0
    %1894 = vmatprep.subr.mxu0 0.0
    %1895 = vmatpush1.xpose.msra.mxu0 0.0
    %1896 = vmatprep.subr.mxu0 0.0
    %1897 = vmatpush1.xpose.msra.mxu0 0.0
    %1898 = vmatprep.subr.mxu0 0.0
    %1899 = vmatpush1.xpose.msra.mxu0 %v1866
    %1900 = vmatprep.subr.mxu0 0.0
    %1901 = vmatpush2.xpose.msra.mxu0 0.0
    %1902 = vmatprep.subr.mxu0 0.0
    %1903 = vmatpush2.xpose.msra.mxu0 0.0
    %1904 = vmatprep.subr.mxu0 0.0
    %1905 = vmatpush2.xpose.msra.mxu0 0.0
    %1906 = vmatprep.subr.mxu0 0.0
    %1907 = vmatpush2.xpose.msra.mxu0 0.0
    %1908 = vmatprep.subr.mxu0 0.0
    %1909 = vmatpush2.xpose.msra.mxu0 0.0
    %1910 = vmatprep.subr.mxu0 0.0
    %1911 = vmatpush2.xpose.msra.mxu0 0.0
    %1912 = vmatprep.subr.mxu0 0.0
    %1913 = vmatpush2.xpose.msra.mxu0 0.0
    %1914 = vmatprep.subr.mxu0 0.0
    %1915 = vmatpush2.xpose.msra.mxu0 0.0
    %1916 = vmatprep.subr.mxu0 0.0
    %1917 = vmatpush2.xpose.msra.mxu0 0.0
    %1918 = vmatprep.subr.mxu0 0.0
    %1919 = vmatpush2.xpose.msra.mxu0 0.0
    %1920 = vmatprep.subr.mxu0 0.0
    %1921 = vmatpush2.xpose.msra.mxu0 0.0
    %1922 = vmatprep.subr.mxu0 0.0
    %1923 = vmatpush2.xpose.msra.mxu0 0.0
    %1924 = vmatprep.subr.mxu0 0.0
    %1925 = vmatpush2.xpose.msra.mxu0 0.0
    %1926 = vmatprep.subr.mxu0 0.0
    %1927 = vmatpush2.xpose.msra.mxu0 0.0
    %1928 = vmatprep.subr.mxu0 0.0
    %1929 = vmatpush2.xpose.msra.mxu0 0.0
    %1930 = vmatprep.subr.mxu0 0.0
    %1931 = vmatpush2.xpose.msra.mxu0 0.0
    %1932 = vmatprep.mubr.f32.mxu0 0.0
    %1933 = vmatmul.mubr.f32.gmra.mxu0 %v1864
    %v1934 = vpop.f32.mrf.mxu0
    %v1935 = vadd.f32 0.0, %v1934
    %v1936 = vpop.f32.mrf.mxu0
    %1937 = vdwg.mxu0
    %v1938 = vld [vmem:[#allocation7] sm:$0xff]
    %v1939 = vld [vmem:[#allocation7 + $0x8] sm:$0xff]
    %v1940 = vld [vmem:[#allocation7 + $0x10] sm:$0xff]
    %v1941 = vld [vmem:[#allocation7 + $0x18] sm:$0xff]
    %v1942 = vld [vmem:[%s9] sm:$0x1]
    %v1944 = vlaneseq
    %v1945 = vshrl.u32 %v1944, 7
    %v1946 = vsub.s32 0, %v1945
    %v1947 = vrot.slane %v1942, %v1946
    %v1949 = vadd.f32 %v112, %v1947
    %v1950 = vadd.f32 %v113, %v1947
    %v1952 = vsel %vm603, %v1029, 0
    %v1955 = vsel %vm603, %v1704, 0
    %1957 = vmatprep.subr.mxu0 0.0
    %1958 = vmatpush1.msra.mxu0 0.0
    %1959 = vmatprep.subr.mxu0 0.0
    %1960 = vmatpush1.msra.mxu0 0.0
    %1961 = vmatprep.subr.mxu0 0.0
    %1962 = vmatpush1.msra.mxu0 0.0
    %1963 = vmatprep.subr.mxu0 0.0
    %1964 = vmatpush1.msra.mxu0 0.0
    %1965 = vmatprep.subr.mxu0 0.0
    %1966 = vmatpush1.msra.mxu0 0.0
    %1967 = vmatprep.subr.mxu0 0.0
    %1968 = vmatpush1.msra.mxu0 0.0
    %1969 = vmatprep.subr.mxu0 0.0
    %1970 = vmatpush1.msra.mxu0 0.0
    %1971 = vmatprep.subr.mxu0 0.0
    %1972 = vmatpush1.msra.mxu0 0.0
    %1973 = vmatprep.subr.mxu0 0.0
    %1974 = vmatpush1.msra.mxu0 0.0
    %1975 = vmatprep.subr.mxu0 0.0
    %1976 = vmatpush1.msra.mxu0 0.0
    %1977 = vmatprep.subr.mxu0 0.0
    %1978 = vmatpush1.msra.mxu0 0.0
    %1979 = vmatprep.subr.mxu0 0.0
    %1980 = vmatpush1.msra.mxu0 0.0
    %1981 = vmatprep.subr.mxu0 0.0
    %1982 = vmatpush1.msra.mxu0 0.0
    %1983 = vmatprep.subr.mxu0 0.0
    %1984 = vmatpush1.msra.mxu0 0.0
    %1985 = vmatprep.subr.mxu0 0.0
    %1986 = vmatpush1.msra.mxu0 0.0
    %1987 = vmatprep.subr.mxu0 0.0
    %1988 = vmatpush1.msra.mxu0 %v1938
    %1989 = vmatprep.subr.mxu0 0.0
    %1990 = vmatpush2.msra.mxu0 0.0
    %1991 = vmatprep.subr.mxu0 0.0
    %1992 = vmatpush2.msra.mxu0 0.0
    %1993 = vmatprep.subr.mxu0 0.0
    %1994 = vmatpush2.msra.mxu0 0.0
    %1995 = vmatprep.subr.mxu0 0.0
    %1996 = vmatpush2.msra.mxu0 0.0
    %1997 = vmatprep.subr.mxu0 0.0
    %1998 = vmatpush2.msra.mxu0 0.0
    %1999 = vmatprep.subr.mxu0 0.0
    %2000 = vmatpush2.msra.mxu0 0.0
    %2001 = vmatprep.subr.mxu0 0.0
    %2002 = vmatpush2.msra.mxu0 0.0
    %2003 = vmatprep.subr.mxu0 0.0
    %2004 = vmatpush2.msra.mxu0 0.0
    %2005 = vmatprep.subr.mxu0 0.0
    %2006 = vmatpush2.msra.mxu0 0.0
    %2007 = vmatprep.subr.mxu0 0.0
    %2008 = vmatpush2.msra.mxu0 0.0
    %2009 = vmatprep.subr.mxu0 0.0
    %2010 = vmatpush2.msra.mxu0 0.0
    %2011 = vmatprep.subr.mxu0 0.0
    %2012 = vmatpush2.msra.mxu0 0.0
    %2013 = vmatprep.subr.mxu0 0.0
    %2014 = vmatpush2.msra.mxu0 0.0
    %2015 = vmatprep.subr.mxu0 0.0
    %2016 = vmatpush2.msra.mxu0 0.0
    %2017 = vmatprep.subr.mxu0 0.0
    %2018 = vmatpush2.msra.mxu0 0.0
    %2019 = vmatprep.subr.mxu0 0.0
    %2020 = vmatpush2.msra.mxu0 0.0
    %2021 = vmatprep.mubr.f32.mxu0 0.0
    %2022 = vmatmul.mubr.f32.gmra.mxu0 %v1952
    %v2023 = vpop.f32.mrf.mxu0
    %v2024 = vadd.f32 0.0, %v2023
    %v2025 = vpop.f32.mrf.mxu0
    %2026 = vmatprep.mubr.f32.mxu0 0.0
    %2027 = vmatmul.mubr.f32.gmra.mxu0 %v1955
    %v2028 = vpop.f32.mrf.mxu0
    %v2029 = vadd.f32 0.0, %v2028
    %v2030 = vpop.f32.mrf.mxu0
    %2031 = vdwg.mxu0
    %v2032 = vadd.f32 %v1949, %v2024
    %v2033 = vadd.f32 %v1950, %v2029
    %v2035 = vsel %vm603, %v1105, 0
    %v2038 = vsel %vm603, %v1781, 0
    %2040 = vmatprep.subr.mxu0 0.0
    %2041 = vmatpush1.msra.mxu0 0.0
    %2042 = vmatprep.subr.mxu0 0.0
    %2043 = vmatpush1.msra.mxu0 0.0
    %2044 = vmatprep.subr.mxu0 0.0
    %2045 = vmatpush1.msra.mxu0 0.0
    %2046 = vmatprep.subr.mxu0 0.0
    %2047 = vmatpush1.msra.mxu0 0.0
    %2048 = vmatprep.subr.mxu0 0.0
    %2049 = vmatpush1.msra.mxu0 0.0
    %2050 = vmatprep.subr.mxu0 0.0
    %2051 = vmatpush1.msra.mxu0 0.0
    %2052 = vmatprep.subr.mxu0 0.0
    %2053 = vmatpush1.msra.mxu0 0.0
    %2054 = vmatprep.subr.mxu0 0.0
    %2055 = vmatpush1.msra.mxu0 0.0
    %2056 = vmatprep.subr.mxu0 0.0
    %2057 = vmatpush1.msra.mxu0 0.0
    %2058 = vmatprep.subr.mxu0 0.0
    %2059 = vmatpush1.msra.mxu0 0.0
    %2060 = vmatprep.subr.mxu0 0.0
    %2061 = vmatpush1.msra.mxu0 0.0
    %2062 = vmatprep.subr.mxu0 0.0
    %2063 = vmatpush1.msra.mxu0 0.0
    %2064 = vmatprep.subr.mxu0 0.0
    %2065 = vmatpush1.msra.mxu0 0.0
    %2066 = vmatprep.subr.mxu0 0.0
    %2067 = vmatpush1.msra.mxu0 0.0
    %2068 = vmatprep.subr.mxu0 0.0
    %2069 = vmatpush1.msra.mxu0 0.0
    %2070 = vmatprep.subr.mxu0 0.0
    %2071 = vmatpush1.msra.mxu0 %v1939
    %2072 = vmatprep.subr.mxu0 0.0
    %2073 = vmatpush2.msra.mxu0 0.0
    %2074 = vmatprep.subr.mxu0 0.0
    %2075 = vmatpush2.msra.mxu0 0.0
    %2076 = vmatprep.subr.mxu0 0.0
    %2077 = vmatpush2.msra.mxu0 0.0
    %2078 = vmatprep.subr.mxu0 0.0
    %2079 = vmatpush2.msra.mxu0 0.0
    %2080 = vmatprep.subr.mxu0 0.0
    %2081 = vmatpush2.msra.mxu0 0.0
    %2082 = vmatprep.subr.mxu0 0.0
    %2083 = vmatpush2.msra.mxu0 0.0
    %2084 = vmatprep.subr.mxu0 0.0
    %2085 = vmatpush2.msra.mxu0 0.0
    %2086 = vmatprep.subr.mxu0 0.0
    %2087 = vmatpush2.msra.mxu0 0.0
    %2088 = vmatprep.subr.mxu0 0.0
    %2089 = vmatpush2.msra.mxu0 0.0
    %2090 = vmatprep.subr.mxu0 0.0
    %2091 = vmatpush2.msra.mxu0 0.0
    %2092 = vmatprep.subr.mxu0 0.0
    %2093 = vmatpush2.msra.mxu0 0.0
    %2094 = vmatprep.subr.mxu0 0.0
    %2095 = vmatpush2.msra.mxu0 0.0
    %2096 = vmatprep.subr.mxu0 0.0
    %2097 = vmatpush2.msra.mxu0 0.0
    %2098 = vmatprep.subr.mxu0 0.0
    %2099 = vmatpush2.msra.mxu0 0.0
    %2100 = vmatprep.subr.mxu0 0.0
    %2101 = vmatpush2.msra.mxu0 0.0
    %2102 = vmatprep.subr.mxu0 0.0
    %2103 = vmatpush2.msra.mxu0 0.0
    %2104 = vmatprep.mubr.f32.mxu0 0.0
    %2105 = vmatmul.mubr.f32.gmra.mxu0 %v2035
    %v2106 = vpop.f32.mrf.mxu0
    %v2107 = vadd.f32 0.0, %v2106
    %v2108 = vpop.f32.mrf.mxu0
    %2109 = vmatprep.mubr.f32.mxu0 0.0
    %2110 = vmatmul.mubr.f32.gmra.mxu0 %v2038
    %v2111 = vpop.f32.mrf.mxu0
    %v2112 = vadd.f32 0.0, %v2111
    %v2113 = vpop.f32.mrf.mxu0
    %2114 = vdwg.mxu0
    %v2115 = vadd.f32 %v2032, %v2107
    %v2116 = vadd.f32 %v2033, %v2112
    %v2118 = vsel %vm603, %v1181, 0
    %v2121 = vsel %vm603, %v1858, 0
    %2123 = vmatprep.subr.mxu0 0.0
    %2124 = vmatpush1.msra.mxu0 0.0
    %2125 = vmatprep.subr.mxu0 0.0
    %2126 = vmatpush1.msra.mxu0 0.0
    %2127 = vmatprep.subr.mxu0 0.0
    %2128 = vmatpush1.msra.mxu0 0.0
    %2129 = vmatprep.subr.mxu0 0.0
    %2130 = vmatpush1.msra.mxu0 0.0
    %2131 = vmatprep.subr.mxu0 0.0
    %2132 = vmatpush1.msra.mxu0 0.0
    %2133 = vmatprep.subr.mxu0 0.0
    %2134 = vmatpush1.msra.mxu0 0.0
    %2135 = vmatprep.subr.mxu0 0.0
    %2136 = vmatpush1.msra.mxu0 0.0
    %2137 = vmatprep.subr.mxu0 0.0
    %2138 = vmatpush1.msra.mxu0 0.0
    %2139 = vmatprep.subr.mxu0 0.0
    %2140 = vmatpush1.msra.mxu0 0.0
    %2141 = vmatprep.subr.mxu0 0.0
    %2142 = vmatpush1.msra.mxu0 0.0
    %2143 = vmatprep.subr.mxu0 0.0
    %2144 = vmatpush1.msra.mxu0 0.0
    %2145 = vmatprep.subr.mxu0 0.0
    %2146 = vmatpush1.msra.mxu0 0.0
    %2147 = vmatprep.subr.mxu0 0.0
    %2148 = vmatpush1.msra.mxu0 0.0
    %2149 = vmatprep.subr.mxu0 0.0
    %2150 = vmatpush1.msra.mxu0 0.0
    %2151 = vmatprep.subr.mxu0 0.0
    %2152 = vmatpush1.msra.mxu0 0.0
    %2153 = vmatprep.subr.mxu0 0.0
    %2154 = vmatpush1.msra.mxu0 %v1940
    %2155 = vmatprep.subr.mxu0 0.0
    %2156 = vmatpush2.msra.mxu0 0.0
    %2157 = vmatprep.subr.mxu0 0.0
    %2158 = vmatpush2.msra.mxu0 0.0
    %2159 = vmatprep.subr.mxu0 0.0
    %2160 = vmatpush2.msra.mxu0 0.0
    %2161 = vmatprep.subr.mxu0 0.0
    %2162 = vmatpush2.msra.mxu0 0.0
    %2163 = vmatprep.subr.mxu0 0.0
    %2164 = vmatpush2.msra.mxu0 0.0
    %2165 = vmatprep.subr.mxu0 0.0
    %2166 = vmatpush2.msra.mxu0 0.0
    %2167 = vmatprep.subr.mxu0 0.0
    %2168 = vmatpush2.msra.mxu0 0.0
    %2169 = vmatprep.subr.mxu0 0.0
    %2170 = vmatpush2.msra.mxu0 0.0
    %2171 = vmatprep.subr.mxu0 0.0
    %2172 = vmatpush2.msra.mxu0 0.0
    %2173 = vmatprep.subr.mxu0 0.0
    %2174 = vmatpush2.msra.mxu0 0.0
    %2175 = vmatprep.subr.mxu0 0.0
    %2176 = vmatpush2.msra.mxu0 0.0
    %2177 = vmatprep.subr.mxu0 0.0
    %2178 = vmatpush2.msra.mxu0 0.0
    %2179 = vmatprep.subr.mxu0 0.0
    %2180 = vmatpush2.msra.mxu0 0.0
    %2181 = vmatprep.subr.mxu0 0.0
    %2182 = vmatpush2.msra.mxu0 0.0
    %2183 = vmatprep.subr.mxu0 0.0
    %2184 = vmatpush2.msra.mxu0 0.0
    %2185 = vmatprep.subr.mxu0 0.0
    %2186 = vmatpush2.msra.mxu0 0.0
    %2187 = vmatprep.mubr.f32.mxu0 0.0
    %2188 = vmatmul.mubr.f32.gmra.mxu0 %v2118
    %v2189 = vpop.f32.mrf.mxu0
    %v2190 = vadd.f32 0.0, %v2189
    %v2191 = vpop.f32.mrf.mxu0
    %2192 = vmatprep.mubr.f32.mxu0 0.0
    %2193 = vmatmul.mubr.f32.gmra.mxu0 %v2121
    %v2194 = vpop.f32.mrf.mxu0
    %v2195 = vadd.f32 0.0, %v2194
    %v2196 = vpop.f32.mrf.mxu0
    %2197 = vdwg.mxu0
    %v2198 = vadd.f32 %v2115, %v2190
    %v2199 = vadd.f32 %v2116, %v2195
    %v2201 = vsel %vm603, %v1257, 0
    %v2204 = vsel %vm603, %v1935, 0
    %2206 = vmatprep.subr.mxu0 0.0
    %2207 = vmatpush1.msra.mxu0 0.0
    %2208 = vmatprep.subr.mxu0 0.0
    %2209 = vmatpush1.msra.mxu0 0.0
    %2210 = vmatprep.subr.mxu0 0.0
    %2211 = vmatpush1.msra.mxu0 0.0
    %2212 = vmatprep.subr.mxu0 0.0
    %2213 = vmatpush1.msra.mxu0 0.0
    %2214 = vmatprep.subr.mxu0 0.0
    %2215 = vmatpush1.msra.mxu0 0.0
    %2216 = vmatprep.subr.mxu0 0.0
    %2217 = vmatpush1.msra.mxu0 0.0
    %2218 = vmatprep.subr.mxu0 0.0
    %2219 = vmatpush1.msra.mxu0 0.0
    %2220 = vmatprep.subr.mxu0 0.0
    %2221 = vmatpush1.msra.mxu0 0.0
    %2222 = vmatprep.subr.mxu0 0.0
    %2223 = vmatpush1.msra.mxu0 0.0
    %2224 = vmatprep.subr.mxu0 0.0
    %2225 = vmatpush1.msra.mxu0 0.0
    %2226 = vmatprep.subr.mxu0 0.0
    %2227 = vmatpush1.msra.mxu0 0.0
    %2228 = vmatprep.subr.mxu0 0.0
    %2229 = vmatpush1.msra.mxu0 0.0
    %2230 = vmatprep.subr.mxu0 0.0
    %2231 = vmatpush1.msra.mxu0 0.0
    %2232 = vmatprep.subr.mxu0 0.0
    %2233 = vmatpush1.msra.mxu0 0.0
    %2234 = vmatprep.subr.mxu0 0.0
    %2235 = vmatpush1.msra.mxu0 0.0
    %2236 = vmatprep.subr.mxu0 0.0
    %2237 = vmatpush1.msra.mxu0 %v1941
    %2238 = vmatprep.subr.mxu0 0.0
    %2239 = vmatpush2.msra.mxu0 0.0
    %2240 = vmatprep.subr.mxu0 0.0
    %2241 = vmatpush2.msra.mxu0 0.0
    %2242 = vmatprep.subr.mxu0 0.0
    %2243 = vmatpush2.msra.mxu0 0.0
    %2244 = vmatprep.subr.mxu0 0.0
    %2245 = vmatpush2.msra.mxu0 0.0
    %2246 = vmatprep.subr.mxu0 0.0
    %2247 = vmatpush2.msra.mxu0 0.0
    %2248 = vmatprep.subr.mxu0 0.0
    %2249 = vmatpush2.msra.mxu0 0.0
    %2250 = vmatprep.subr.mxu0 0.0
    %2251 = vmatpush2.msra.mxu0 0.0
    %2252 = vmatprep.subr.mxu0 0.0
    %2253 = vmatpush2.msra.mxu0 0.0
    %2254 = vmatprep.subr.mxu0 0.0
    %2255 = vmatpush2.msra.mxu0 0.0
    %2256 = vmatprep.subr.mxu0 0.0
    %2257 = vmatpush2.msra.mxu0 0.0
    %2258 = vmatprep.subr.mxu0 0.0
    %2259 = vmatpush2.msra.mxu0 0.0
    %2260 = vmatprep.subr.mxu0 0.0
    %2261 = vmatpush2.msra.mxu0 0.0
    %2262 = vmatprep.subr.mxu0 0.0
    %2263 = vmatpush2.msra.mxu0 0.0
    %2264 = vmatprep.subr.mxu0 0.0
    %2265 = vmatpush2.msra.mxu0 0.0
    %2266 = vmatprep.subr.mxu0 0.0
    %2267 = vmatpush2.msra.mxu0 0.0
    %2268 = vmatprep.subr.mxu0 0.0
    %2269 = vmatpush2.msra.mxu0 0.0
    %2270 = vmatprep.mubr.f32.mxu0 0.0
    %2271 = vmatmul.mubr.f32.gmra.mxu0 %v2201
    %v2272 = vpop.f32.mrf.mxu0
    %v2273 = vadd.f32 0.0, %v2272
    %v2274 = vpop.f32.mrf.mxu0
    %2275 = vmatprep.mubr.f32.mxu0 0.0
    %2276 = vmatmul.mubr.f32.gmra.mxu0 %v2204
    %v2277 = vpop.f32.mrf.mxu0
    %v2278 = vadd.f32 0.0, %v2277
    %v2279 = vpop.f32.mrf.mxu0
    %2280 = vdwg.mxu0
    %v2281 = vadd.f32 %v2198, %v2273
    %v2282 = vadd.f32 %v2199, %v2278
    %v2283 = vld [vmem:[%s10] sm:$0x1]
    %v2284 = vld [vmem:[%s11] sm:$0x1]
    %v2285 = vsel %vm125, %v2281, 0.0
    %2286 = vadd.xlane.f32.xlu0 %v2285
    %v2287 = vpop.xlane.xlu0 %2286
    %v2288 = vsel %vm125, %v2282, 0.0
    %2289 = vadd.xlane.f32.xlu0 %v2288
    %v2290 = vpop.xlane.xlu0 %2289
    %v2291 = vrcp.pop 32.0
    %v2292 = vmul.f32 %v2287, %v2291
    %v2293 = vmul.f32 %v2290, %v2291
    %v2294 = vsub.f32 %v2281, %v2292
    %v2295 = vsub.f32 %v2282, %v2293
    %v2296 = vmul.f32 %v2294, %v2294
    %v2297 = vmul.f32 %v2295, %v2295
    %v2298 = vsel %vm125, %v2296, 0.0
    %2299 = vadd.xlane.f32.xlu0 %v2298
    %v2300 = vpop.xlane.xlu0 %2299
    %v2301 = vsel %vm125, %v2297, 0.0
    %2302 = vadd.xlane.f32.xlu0 %v2301
    %v2303 = vpop.xlane.xlu0 %2302
    %v2304 = vmul.f32 %v2300, %v2291
    %v2305 = vmul.f32 %v2303, %v2291
    %v2306 = vadd.f32 %v2304, 1e-05
    %v2307 = vadd.f32 %v2305, 1e-05
    %v2308 = vrsqrt.pop %v2306
    %v2309 = vrsqrt.pop %v2307
    %v2310 = vmul.f32 %v2294, %v2308
    %v2311 = vmul.f32 %v2295, %v2309
    %v2313 = vlaneseq
    %v2314 = vshrl.u32 %v2313, 7
    %v2315 = vsub.s32 0, %v2314
    %v2316 = vrot.slane %v2283, %v2315
    %v2318 = vmul.f32 %v2310, %v2316
    %v2319 = vmul.f32 %v2311, %v2316
    %v2321 = vlaneseq
    %v2322 = vshrl.u32 %v2321, 7
    %v2323 = vsub.s32 0, %v2322
    %v2324 = vrot.slane %v2284, %v2323
    %v2326 = vadd.f32 %v2318, %v2324
    %v2327 = vadd.f32 %v2319, %v2324
    %v2328 = vld [vmem:[#allocation8] sm:$0xff]
    %v2329 = vld [vmem:[#allocation8 + $0x8] sm:$0xff]
    %v2330 = vld [vmem:[#allocation8 + $0x10] sm:$0xff]
    %v2331 = vld [vmem:[#allocation8 + $0x18] sm:$0xff]
    %v2332 = vld [vmem:[%s13] sm:$0x1]
    %v2334 = vlaneseq
    %v2335 = vshrl.u32 %v2334, 7
    %v2336 = vsub.s32 0, %v2335
    %v2337 = vrot.slane %v2332, %v2336
    %v2340 = vsel %vm125, %v2326, 0
    %v2343 = vsel %vm125, %v2327, 0
    %2345 = vmatprep.subr.mxu0 0.0
    %2346 = vmatpush1.msra.mxu0 0.0
    %2347 = vmatprep.subr.mxu0 0.0
    %2348 = vmatpush1.msra.mxu0 0.0
    %2349 = vmatprep.subr.mxu0 0.0
    %2350 = vmatpush1.msra.mxu0 0.0
    %2351 = vmatprep.subr.mxu0 0.0
    %2352 = vmatpush1.msra.mxu0 0.0
    %2353 = vmatprep.subr.mxu0 0.0
    %2354 = vmatpush1.msra.mxu0 0.0
    %2355 = vmatprep.subr.mxu0 0.0
    %2356 = vmatpush1.msra.mxu0 0.0
    %2357 = vmatprep.subr.mxu0 0.0
    %2358 = vmatpush1.msra.mxu0 0.0
    %2359 = vmatprep.subr.mxu0 0.0
    %2360 = vmatpush1.msra.mxu0 0.0
    %2361 = vmatprep.subr.mxu0 0.0
    %2362 = vmatpush1.msra.mxu0 0.0
    %2363 = vmatprep.subr.mxu0 0.0
    %2364 = vmatpush1.msra.mxu0 0.0
    %2365 = vmatprep.subr.mxu0 0.0
    %2366 = vmatpush1.msra.mxu0 0.0
    %2367 = vmatprep.subr.mxu0 0.0
    %2368 = vmatpush1.msra.mxu0 0.0
    %2369 = vmatprep.subr.mxu0 0.0
    %2370 = vmatpush1.msra.mxu0 %v2331
    %2371 = vmatprep.subr.mxu0 0.0
    %2372 = vmatpush1.msra.mxu0 %v2330
    %2373 = vmatprep.subr.mxu0 0.0
    %2374 = vmatpush1.msra.mxu0 %v2329
    %2375 = vmatprep.subr.mxu0 0.0
    %2376 = vmatpush1.msra.mxu0 %v2328
    %2377 = vmatprep.subr.mxu0 0.0
    %2378 = vmatpush2.msra.mxu0 0.0
    %2379 = vmatprep.subr.mxu0 0.0
    %2380 = vmatpush2.msra.mxu0 0.0
    %2381 = vmatprep.subr.mxu0 0.0
    %2382 = vmatpush2.msra.mxu0 0.0
    %2383 = vmatprep.subr.mxu0 0.0
    %2384 = vmatpush2.msra.mxu0 0.0
    %2385 = vmatprep.subr.mxu0 0.0
    %2386 = vmatpush2.msra.mxu0 0.0
    %2387 = vmatprep.subr.mxu0 0.0
    %2388 = vmatpush2.msra.mxu0 0.0
    %2389 = vmatprep.subr.mxu0 0.0
    %2390 = vmatpush2.msra.mxu0 0.0
    %2391 = vmatprep.subr.mxu0 0.0
    %2392 = vmatpush2.msra.mxu0 0.0
    %2393 = vmatprep.subr.mxu0 0.0
    %2394 = vmatpush2.msra.mxu0 0.0
    %2395 = vmatprep.subr.mxu0 0.0
    %2396 = vmatpush2.msra.mxu0 0.0
    %2397 = vmatprep.subr.mxu0 0.0
    %2398 = vmatpush2.msra.mxu0 0.0
    %2399 = vmatprep.subr.mxu0 0.0
    %2400 = vmatpush2.msra.mxu0 0.0
    %2401 = vmatprep.subr.mxu0 0.0
    %2402 = vmatpush2.msra.mxu0 0.0
    %2403 = vmatprep.subr.mxu0 0.0
    %2404 = vmatpush2.msra.mxu0 0.0
    %2405 = vmatprep.subr.mxu0 0.0
    %2406 = vmatpush2.msra.mxu0 0.0
    %2407 = vmatprep.subr.mxu0 0.0
    %2408 = vmatpush2.msra.mxu0 0.0
    %2409 = vmatprep.mubr.f32.mxu0 0.0
    %2410 = vmatmul.mubr.f32.gmra.mxu0 %v2340
    %v2411 = vpop.f32.mrf.mxu0
    %v2412 = vadd.f32 %v2337, %v2411
    %v2413 = vpop.f32.mrf.mxu0
    %2414 = vmatprep.mubr.f32.mxu0 0.0
    %2415 = vmatmul.mubr.f32.gmra.mxu0 %v2343
    %v2416 = vpop.f32.mrf.mxu0
    %v2417 = vadd.f32 %v2337, %v2416
    %v2418 = vpop.f32.mrf.mxu0
    %2419 = vdwg.mxu0
    %v2420 = vmul.f32 %v2412, 0.5
    %v2421 = vmul.f32 %v2417, 0.5
    %v2422 = vrcp.pop 1.4142135
    %v2423 = vmul.f32 %v2412, %v2422
    %v2424 = vmul.f32 %v2417, %v2422
    %v2425 = verf.f32.pop %v2423
    %v2426 = verf.f32.pop %v2424
    %v2427 = vadd.f32 %v2425, 1.0
    %v2428 = vadd.f32 %v2426, 1.0
    %v2429 = vmul.f32 %v2420, %v2427
    %v2430 = vmul.f32 %v2421, %v2428
    %v2431 = vld [vmem:[%s14] sm:$0xff]
    %v2432 = vld [vmem:[%s14 + $0x8] sm:$0xff]
    %v2433 = vld [vmem:[%s14 + $0x10] sm:$0xff]
    %v2434 = vld [vmem:[%s14 + $0x18] sm:$0xff]
    %v2435 = vld [vmem:[%s14 + $0x20] sm:$0xff]
    %v2436 = vld [vmem:[%s14 + $0x28] sm:$0xff]
    %v2437 = vld [vmem:[%s14 + $0x30] sm:$0xff]
    %v2438 = vld [vmem:[%s14 + $0x38] sm:$0xff]
    %v2439 = vld [vmem:[%s15] sm:$0x1]
    %v2441 = vlaneseq
    %v2442 = vshrl.u32 %v2441, 7
    %v2443 = vsub.s32 0, %v2442
    %v2444 = vrot.slane %v2439, %v2443
    %vm2446 = vcmask 523264
    %v2448 = vsel %vm2446, %v2429, 0
    %v2451 = vsel %vm2446, %v2430, 0
    %2453 = vmatprep.subr.mxu0 0.0
    %2454 = vmatpush1.msra.mxu0 0.0
    %2455 = vmatprep.subr.mxu0 0.0
    %2456 = vmatpush1.msra.mxu0 0.0
    %2457 = vmatprep.subr.mxu0 0.0
    %2458 = vmatpush1.msra.mxu0 0.0
    %2459 = vmatprep.subr.mxu0 0.0
    %2460 = vmatpush1.msra.mxu0 0.0
    %2461 = vmatprep.subr.mxu0 0.0
    %2462 = vmatpush1.msra.mxu0 0.0
    %2463 = vmatprep.subr.mxu0 0.0
    %2464 = vmatpush1.msra.mxu0 0.0
    %2465 = vmatprep.subr.mxu0 0.0
    %2466 = vmatpush1.msra.mxu0 0.0
    %2467 = vmatprep.subr.mxu0 0.0
    %2468 = vmatpush1.msra.mxu0 0.0
    %2469 = vmatprep.subr.mxu0 0.0
    %2470 = vmatpush1.msra.mxu0 %v2438
    %2471 = vmatprep.subr.mxu0 0.0
    %2472 = vmatpush1.msra.mxu0 %v2437
    %2473 = vmatprep.subr.mxu0 0.0
    %2474 = vmatpush1.msra.mxu0 %v2436
    %2475 = vmatprep.subr.mxu0 0.0
    %2476 = vmatpush1.msra.mxu0 %v2435
    %2477 = vmatprep.subr.mxu0 0.0
    %2478 = vmatpush1.msra.mxu0 %v2434
    %2479 = vmatprep.subr.mxu0 0.0
    %2480 = vmatpush1.msra.mxu0 %v2433
    %2481 = vmatprep.subr.mxu0 0.0
    %2482 = vmatpush1.msra.mxu0 %v2432
    %2483 = vmatprep.subr.mxu0 0.0
    %2484 = vmatpush1.msra.mxu0 %v2431
    %2485 = vmatprep.subr.mxu0 0.0
    %2486 = vmatpush2.msra.mxu0 0.0
    %2487 = vmatprep.subr.mxu0 0.0
    %2488 = vmatpush2.msra.mxu0 0.0
    %2489 = vmatprep.subr.mxu0 0.0
    %2490 = vmatpush2.msra.mxu0 0.0
    %2491 = vmatprep.subr.mxu0 0.0
    %2492 = vmatpush2.msra.mxu0 0.0
    %2493 = vmatprep.subr.mxu0 0.0
    %2494 = vmatpush2.msra.mxu0 0.0
    %2495 = vmatprep.subr.mxu0 0.0
    %2496 = vmatpush2.msra.mxu0 0.0
    %2497 = vmatprep.subr.mxu0 0.0
    %2498 = vmatpush2.msra.mxu0 0.0
    %2499 = vmatprep.subr.mxu0 0.0
    %2500 = vmatpush2.msra.mxu0 0.0
    %2501 = vmatprep.subr.mxu0 0.0
    %2502 = vmatpush2.msra.mxu0 0.0
    %2503 = vmatprep.subr.mxu0 0.0
    %2504 = vmatpush2.msra.mxu0 0.0
    %2505 = vmatprep.subr.mxu0 0.0
    %2506 = vmatpush2.msra.mxu0 0.0
    %2507 = vmatprep.subr.mxu0 0.0
    %2508 = vmatpush2.msra.mxu0 0.0
    %2509 = vmatprep.subr.mxu0 0.0
    %2510 = vmatpush2.msra.mxu0 0.0
    %2511 = vmatprep.subr.mxu0 0.0
    %2512 = vmatpush2.msra.mxu0 0.0
    %2513 = vmatprep.subr.mxu0 0.0
    %2514 = vmatpush2.msra.mxu0 0.0
    %2515 = vmatprep.subr.mxu0 0.0
    %2516 = vmatpush2.msra.mxu0 0.0
    %2517 = vmatprep.mubr.f32.mxu0 0.0
    %2518 = vmatmul.mubr.f32.gmra.mxu0 %v2448
    %v2519 = vpop.f32.mrf.mxu0
    %v2520 = vadd.f32 %v2444, %v2519
    %v2521 = vpop.f32.mrf.mxu0
    %2522 = vmatprep.mubr.f32.mxu0 0.0
    %2523 = vmatmul.mubr.f32.gmra.mxu0 %v2451
    %v2524 = vpop.f32.mrf.mxu0
    %v2525 = vadd.f32 %v2444, %v2524
    %v2526 = vpop.f32.mrf.mxu0
    %2527 = vdwg.mxu0
    %2528 = vst.msk [vmem:[#allocation10] sm:$0xff] %vm125, %v2520
    %2529 = vst.msk [vmem:[#allocation10 + $0x8] sm:$0xff] %vm125, %v2525
    // Predicated region
    $region82: #{tpu_custom_call.1} parent=1 // pred_check
      _
    $region83: #{tpu_custom_call.1} parent=1 // pred_check_branch
      %2531 = sbr.rel (0) target = $region85
    $region84: #{tpu_custom_call.1} parent=1 // pred_region
      %s2533 = ssub.s32 256, 256
      %2534 = vsyncadd [#allocation4], %s2533
      %s2535 = sshll.u32 [#allocation10], 4
      %s2536 = int_to_ptr.vmem [resolvable:$true] %s2535
      %2541 = dma.vmem_to_hbm [thread:$0]  %s2536, 256, %s16, [#allocation4], 128, 128, 8
    $region85: #{tpu_custom_call.1} parent=1 // pred_fallthru
      _
    // Predicated region
    $region86: #{tpu_custom_call.1} parent=1 // pred_check
      _
    $region87: #{tpu_custom_call.1} parent=1 // pred_check_branch
      %2543 = sbr.rel (0) target = $region89
    $region88: #{tpu_custom_call.1} parent=1 // pred_region
      %s2545 = ssub.s32 1024, 1024
      %2546 = vsyncadd [#allocation12], %s2545
      %s2547 = sshll.u32 [#allocation11], 4
      %s2548 = int_to_ptr.vmem [resolvable:$true] %s2547
      %2553 = dma.vmem_to_hbm [thread:$0]  %s2548, 1024, %s17, [#allocation12], 128, 128, 8
    $region89: #{tpu_custom_call.1} parent=1 // pred_fallthru
      _
    // Predicated region
    $region90: #{tpu_custom_call.1} parent=1 // pred_check
      _
    $region91: #{tpu_custom_call.1} parent=1 // pred_check_branch
      %2555 = sbr.rel (0) target = $region93
    $region92: #{tpu_custom_call.1} parent=1 // pred_region
      %2556 = dma.done [#allocation4], 256
    $region93: #{tpu_custom_call.1} parent=1 // pred_fallthru
      _
    // Predicated region
    $region94: #{tpu_custom_call.1} parent=1 // pred_check
      _
    $region95: #{tpu_custom_call.1} parent=1 // pred_check_branch
      %2558 = sbr.rel (0) target = $region97
    $region96: #{tpu_custom_call.1} parent=1 // pred_region
      %2559 = dma.done [#allocation12], 1024
    $region97: #{tpu_custom_call.1} parent=1 // pred_fallthru
      _
    %2560 = vsyncpa [#allocation3], 1
    %2561 = vsyncpa [#allocation6], 1
    %2562 = vsyncpa [#allocation9], 1
    %2563 = vsyncpa [#allocation4], 1
    %2564 = vsyncpa [#allocation12], 1

</llo_original>
